<compile_context>
chip_gen: v5e
topology: v5e:2x2
jax: 0.10.0
libtpu: 0.0.40
codegen_flags: <defaults>
</compile_context>

<pallas_src>
import functools

import jax
import jax.numpy as jnp
from jax import lax
from jax.experimental import pallas as pl
from jax.experimental.pallas import tpu as pltpu


def _cdiv(a, b):
    return (a + b - 1) // b


def _round_up(a, b):
    return _cdiv(a, b) * b


def _ggnn_kernel(step, cdt, d_model,
                 mi_ref, mo_ref, h_ref,
                 w_h4_ref, b_h4_ref, w_as3_ref, b3_ref, w_uo_ref,
                 o_ref):
    f32 = jnp.float32
    D = d_model
    G, GBL, _ = mi_ref.shape          # block-diag adjacency groups per grid step
    M = h_ref.shape[0]                # rows per grid step (= batch_block * L)

    # Block-diagonal adjacency tiles (built wrapper-side, lane-dense).
    Mi = mi_ref[...].astype(cdt)      # (G, GBL, GBL)
    Mo = mo_ref[...].astype(cdt)

    # Fused weights, resident across the recurrence.
    w_h4 = w_h4_ref[...].astype(cdt)      # (D, pad(4D,128)) : [in | out | uz | ur]
    w_as3 = w_as3_ref[...].astype(cdt)    # (2D, pad(3D,128)): [asz | asr | wh]
    w_uo = w_uo_ref[...].astype(cdt)      # (D, D)
    b_h4 = b_h4_ref[...]                  # (1, pad(4D)) f32 : [b_in | b_out | 0 | 0]
    b3 = b3_ref[...]                      # (1, pad(3D)) f32 : [basz+buz|basr+bur|bwh+buo]

    h2 = h_ref[...].astype(f32)           # (M, D) recurrence state, kept f32

    def cell(h2):
        hc = h2.astype(cdt)
        # One lane-dense matmul for [linear_in | linear_out | U_z | U_r].
        h4 = jnp.dot(hc, w_h4, preferred_element_type=f32) + b_h4       # (M, 4Dp)

        # Graph propagation: block-diagonal (GBL x GBL) @ (GBL, D) per group.
        hin = h4[:, :D].astype(cdt).reshape(G, GBL, D)
        hout = h4[:, D:2 * D].astype(cdt).reshape(G, GBL, D)
        asi = jnp.einsum('gij,gjd->gid', Mi, hin, preferred_element_type=f32)
        aso = jnp.einsum('gij,gjd->gid', Mo, hout, preferred_element_type=f32)
        As = jnp.concatenate([asi, aso], axis=-1).reshape(M, 2 * D).astype(cdt)

        # Fused [z | r | h~] pre-activations (biases pre-summed, N padded to 128).
        as3 = jnp.dot(As, w_as3, preferred_element_type=f32) + b3       # (M, 3Dp)

        zr = jax.nn.sigmoid(as3[:, :2 * D] + h4[:, 2 * D:4 * D])
        Zs = zr[:, :D]
        Rs = zr[:, D:2 * D]
        e_ = jnp.tanh(as3[:, 2 * D:3 * D]
                      + jnp.dot((Rs * h2).astype(cdt), w_uo,
                                preferred_element_type=f32))
        # (1 - Z) * h + Z * e  ==  h + Z * (e - h)
        return h2 + Zs * (e_ - h2)

    if step <= 3:
        for _ in range(step):             # full unroll for short recurrences
            h2 = cell(h2)
    else:
        # Bounded live ranges for deep recurrences; unroll=2 keeps overlap.
        h2 = lax.fori_loop(0, step, lambda _, h: cell(h), h2, unroll=2)

    o_ref[...] = h2.astype(o_ref.dtype)


def _block_diag(m, gb):
    """(Bp, L, L) -> (Bp // gb, gb*L, gb*L) block-diagonal packing."""
    bp, l, _ = m.shape
    g = bp // gb
    mg = m.reshape(g, gb, l, l)
    eye = jnp.eye(gb, dtype=m.dtype)
    out = jnp.einsum('ab,gaij->gaibj', eye, mg)
    return out.reshape(g, gb * l, gb * l)


def _padded_bytes(shape, dtype):
    dims = list(shape)
    dims[-1] = _round_up(dims[-1], 128)
    if len(dims) >= 2:
        dims[-2] = _round_up(dims[-2], 8)
    n = 1
    for d in dims:
        n *= d
    return n * jnp.dtype(dtype).itemsize


def ggnn_pallas(A, hidden, params, step,
                compute_dtype=jnp.bfloat16, batch_block=None):
    """A: [B, L, 2L], hidden: [B, L, D].

    Matmul operands run in `compute_dtype` (bf16 by default: MXU-native on
    v5e/v6e/v7x); the recurrence state and gate math stay f32.
    """
    B, L, twoL = A.shape
    assert twoL == 2 * L
    D = hidden.shape[-1]
    cdt = compute_dtype

    # Samples packed per block-diagonal adjacency tile (lane-dense 128x128).
    # If L does not divide 128 the propagation degrades to per-sample (L,L)
    # matmuls inside the batched einsum (still correct).
    gb = (128 // L) if (L <= 128 and 128 % L == 0) else 1

    # Batch block: ~1024 rows per grid step amortizes the ~0.35us grid-step
    # overhead, but keep >=2 grid steps when the batch allows (v7x: 2 TCs).
    if batch_block is None:
        bb = max(gb, (1024 // (gb * L)) * gb)
        if B <= gb:
            bb = gb
        elif B <= bb:
            bb = _round_up(_cdiv(B, 2), gb)
    else:
        bb = _round_up(max(1, batch_block), gb)
    bb = min(bb, _round_up(B, gb))
    while (bb * L) % 8:                   # sublane-align the (bb*L, D) blocks
        bb += gb
    Bp = _round_up(B, bb)
    grid = Bp // bb
    g_blk = bb // gb
    gbl = gb * L

    # Split A, pad batch, build block-diagonal adjacency in compute dtype.
    Mi = A[:, :, :L]
    Mo = A[:, :, L:]
    hidden_p = hidden
    if Bp != B:
        pad = ((0, Bp - B), (0, 0), (0, 0))
        Mi, Mo = jnp.pad(Mi, pad), jnp.pad(Mo, pad)
        hidden_p = jnp.pad(hidden, pad)
    Mi_bd = _block_diag(Mi.astype(cdt), gb)        # (Bp//gb, gbl, gbl)
    Mo_bd = _block_diag(Mo.astype(cdt), gb)
    hid2 = hidden_p.reshape(Bp * L, D)             # (sample, location)-major rows

    # ---- weight prep: transpose (PyTorch W is [out, in]), fuse, pad to 128 lanes.
    def T(w):
        return jnp.asarray(w, jnp.float32).T

    w_in, w_out = T(params["in.w"]), T(params["out.w"])                      # (D, D)
    w_uz, w_ur, w_uo = T(params["uz.w"]), T(params["ur.w"]), T(params["uo.w"])
    w_asz, w_asr, w_wh = T(params["asz.w"]), T(params["asr.w"]), T(params["wh.w"])  # (2D, D)

    n4 = _round_up(4 * D, 128)
    w_h4 = jnp.zeros((D, n4), jnp.float32).at[:, :4 * D].set(
        jnp.concatenate([w_in, w_out, w_uz, w_ur], axis=1)).astype(cdt)
    b_h4 = jnp.zeros((1, n4), jnp.float32).at[:, :2 * D].set(
        jnp.concatenate([params["in.b"], params["out.b"]])[None, :])

    n3 = _round_up(3 * D, 128)
    w_as3 = jnp.zeros((2 * D, n3), jnp.float32).at[:, :3 * D].set(
        jnp.concatenate([w_asz, w_asr, w_wh], axis=1)).astype(cdt)
    b3 = jnp.zeros((1, n3), jnp.float32).at[:, :3 * D].set(
        jnp.concatenate([params["asz.b"] + params["uz.b"],
                         params["asr.b"] + params["ur.b"],
                         params["wh.b"] + params["uo.b"]])[None, :])
    w_uo_c = w_uo.astype(cdt)

    weight_args = (w_h4, b_h4, w_as3, b3, w_uo_c)

    # Weights are grid-invariant; single-buffer them only when big enough to
    # matter for VMEM (v7x: 64 MiB physical, 32 MiB default scoped limit).
    weight_bytes = sum(int(x.size) * x.dtype.itemsize for x in weight_args)
    single_buf = weight_bytes > (4 << 20)

    def w_spec(x):
        if single_buf:
            return pl.BlockSpec(x.shape, lambda b: (0,) * x.ndim,
                                pipeline_mode=pl.Buffered(1))
        return pl.BlockSpec(x.shape, lambda b: (0,) * x.ndim)

    # VMEM budget estimate (lane/sublane padded, double-buffered stream blocks).
    est = (2 * 2 * _padded_bytes((g_blk, gbl, gbl), cdt)        # Mi, Mo blocks
           + 2 * 2 * _padded_bytes((bb * L, D), hidden.dtype)   # hidden in + out
           + (1 if single_buf else 2)
           * sum(_padded_bytes(x.shape, x.dtype) for x in weight_args))
    vmem_limit = int(min(max(2 * est, 32 << 20), 64 << 20))

    grid_spec = pltpu.PrefetchScalarGridSpec(
        num_scalar_prefetch=0,
        grid=(grid,),
        in_specs=[pl.BlockSpec((g_blk, gbl, gbl), lambda b: (b, 0, 0)),   # Mi
                  pl.BlockSpec((g_blk, gbl, gbl), lambda b: (b, 0, 0)),   # Mo
                  pl.BlockSpec((bb * L, D), lambda b: (b, 0))]            # hidden
                 + [w_spec(w) for w in weight_args],
        out_specs=pl.BlockSpec((bb * L, D), lambda b: (b, 0)),
    )

    kernel = functools.partial(_ggnn_kernel, step, cdt, D)
    out = pl.pallas_call(
        kernel,
        out_shape=jax.ShapeDtypeStruct((Bp * L, D), hidden.dtype),
        grid_spec=grid_spec,
        input_output_aliases={2: 0},       # reuse the hidden buffer for output
        compiler_params=pltpu.CompilerParams(
            dimension_semantics=("parallel",),
            vmem_limit_bytes=vmem_limit),
    )(Mi_bd, Mo_bd, hid2, *weight_args)
    return out.reshape(Bp, L, D)[:B]


def ggnn_reference(A, hidden, params, step):
    """Pure-JAX reference mirroring the PyTorch forward."""
    B, L, _ = A.shape

    def lin(x, w, b):  # PyTorch Linear semantics
        return x @ jnp.asarray(w).T + b

    h = hidden
    for _ in range(step):
        Mi = A[:, :, :L]
        Mo = A[:, :, L:]
        asi = jnp.matmul(Mi, lin(h, params["in.w"], params["in.b"]))
        aso = jnp.matmul(Mo, lin(h, params["out.w"], params["out.b"]))
        As = jnp.concatenate([asi, aso], axis=-1)
        Zs = jax.nn.sigmoid(lin(As, params["asz.w"], params["asz.b"])
                            + lin(h, params["uz.w"], params["uz.b"]))
        Rs = jax.nn.sigmoid(lin(As, params["asr.w"], params["asr.b"])
                            + lin(h, params["ur.w"], params["ur.b"]))
        e_ = jnp.tanh(lin(As, params["wh.w"], params["wh.b"])
                      + lin(Rs * h, params["uo.w"], params["uo.b"]))
        h = (1.0 - Zs) * h + Zs * e_
    return h


def make_params(key, d_model):
    """Deterministic init mimicking nn.Linear's U(-1/sqrt(fan_in), 1/sqrt(fan_in))."""
    names_fanin = [
        ("in", d_model), ("out", d_model),
        ("asz", 2 * d_model), ("asr", 2 * d_model),
        ("uz", d_model), ("ur", d_model),
        ("wh", 2 * d_model), ("uo", d_model),
    ]
    params = {}
    for name, fan_in in names_fanin:
        key, kw, kb = jax.random.split(key, 3)
        bound = 1.0 / jnp.sqrt(fan_in)
        params[f"{name}.w"] = jax.random.uniform(
            kw, (d_model, fan_in), jnp.float32, -bound, bound)
        params[f"{name}.b"] = jax.random.uniform(
            kb, (d_model,), jnp.float32, -bound, bound)
    return params


if __name__ == "__main__":
    B, L, D, STEP = 2, 8, 32, 2   # batch, location_step, d_model, GGNN steps

    key = jax.random.PRNGKey(0)
    k_a, k_h, k_p = jax.random.split(key, 3)

    # A: [B, L, 2L] (normalized-ish adjacency), hidden: [B, L, D]
    A = jax.random.uniform(k_a, (B, L, 2 * L), jnp.float32) / L
    hidden = jax.random.normal(k_h, (B, L, D), jnp.float32)
    params = make_params(k_p, D)

    ref = ggnn_reference(A, hidden, params, STEP)

    # f32 matmul path (matches the reference up to dot re-association).
    out = ggnn_pallas(A, hidden, params, STEP, compute_dtype=jnp.float32)
    out = jax.block_until_ready(out)
    assert out.shape == (B, L, D)
    err = float(jnp.max(jnp.abs(out - ref)))
    assert jnp.allclose(out, ref, atol=1e-4, rtol=1e-4), f"f32 max err {err}"

    # Default bf16 matmul-operand path (MXU-native); gates/recurrence stay f32.
    out_bf16 = ggnn_pallas(A, hidden, params, STEP)
    out_bf16 = jax.block_until_ready(out_bf16)
    err_bf16 = float(jnp.max(jnp.abs(out_bf16 - ref)))
    assert err_bf16 < 0.25, f"bf16 max err {err_bf16}"

    # Larger batch: exercises batch padding, >=2 grid steps (both v7x TCs) and
    # the fori_loop recurrence path (step > 3).
    B2, STEP2 = 40, 4
    k_a2, k_h2 = jax.random.split(jax.random.PRNGKey(1))
    A2 = jax.random.uniform(k_a2, (B2, L, 2 * L), jnp.float32) / L
    hidden2 = jax.random.normal(k_h2, (B2, L, D), jnp.float32)
    ref2 = ggnn_reference(A2, hidden2, params, STEP2)
    out2 = jax.block_until_ready(
        ggnn_pallas(A2, hidden2, params, STEP2, compute_dtype=jnp.float32))
    err2 = float(jnp.max(jnp.abs(out2 - ref2)))
    assert jnp.allclose(out2, ref2, atol=1e-4, rtol=1e-4), f"multi-block max err {err2}"

    print("KERNEL_OK")
</pallas_src>

<mosaic_0001>
module attributes {stable_mosaic.version = 11 : i64} {
  func.func @_ggnn_kernel(%arg0: i32, %arg1: memref<1x128x128xf32, #tpu.memory_space<vmem>>, %arg2: memref<1x128x128xf32, #tpu.memory_space<vmem>>, %arg3: memref<128x32xf32, #tpu.memory_space<vmem>>, %arg4: memref<32x128xf32, #tpu.memory_space<vmem>>, %arg5: memref<1x128xf32, #tpu.memory_space<vmem>>, %arg6: memref<64x128xf32, #tpu.memory_space<vmem>>, %arg7: memref<1x128xf32, #tpu.memory_space<vmem>>, %arg8: memref<32x32xf32, #tpu.memory_space<vmem>>, %arg9: memref<128x32xf32, #tpu.memory_space<vmem>>) attributes {dimension_semantics = [#tpu.dimension_semantics<parallel>], iteration_bounds = array<i64: 1>, scalar_prefetch = 0 : i64, scratch_operands = 0 : i64, tpu.core_type = #tpu.core_type<tc>, window_params = [{transform_indices = @transform_0, window_bounds = array<i64: 1, 128, 128>}, {transform_indices = @transform_1, window_bounds = array<i64: 1, 128, 128>}, {transform_indices = @transform_2, window_bounds = array<i64: 128, 32>}, {pipeline_mode = #tpu.pipeline_mode<synchronous>, transform_indices = @transform_3, window_bounds = array<i64: 32, 128>}, {pipeline_mode = #tpu.pipeline_mode<synchronous>, transform_indices = @transform_4, window_bounds = array<i64: 1, 128>}, {pipeline_mode = #tpu.pipeline_mode<synchronous>, transform_indices = @transform_5, window_bounds = array<i64: 64, 128>}, {pipeline_mode = #tpu.pipeline_mode<synchronous>, transform_indices = @transform_6, window_bounds = array<i64: 1, 128>}, {pipeline_mode = #tpu.pipeline_mode<synchronous>, transform_indices = @transform_7, window_bounds = array<i64: 32, 32>}, {transform_indices = @transform_8, window_bounds = array<i64: 128, 32>}]} {
    %c0 = arith.constant 0 : index
    %c0_0 = arith.constant 0 : index
    %c0_1 = arith.constant 0 : index
    %0 = vector.load %arg1[%c0, %c0_0, %c0_1] : memref<1x128x128xf32, #tpu.memory_space<vmem>>, vector<1x128x128xf32>
    %c0_2 = arith.constant 0 : index
    %c0_3 = arith.constant 0 : index
    %c0_4 = arith.constant 0 : index
    %1 = vector.load %arg2[%c0_2, %c0_3, %c0_4] : memref<1x128x128xf32, #tpu.memory_space<vmem>>, vector<1x128x128xf32>
    %c0_5 = arith.constant 0 : index
    %c0_6 = arith.constant 0 : index
    %2 = vector.load %arg4[%c0_5, %c0_6] : memref<32x128xf32, #tpu.memory_space<vmem>>, vector<32x128xf32>
    %c0_7 = arith.constant 0 : index
    %c0_8 = arith.constant 0 : index
    %3 = vector.load %arg6[%c0_7, %c0_8] : memref<64x128xf32, #tpu.memory_space<vmem>>, vector<64x128xf32>
    %c0_9 = arith.constant 0 : index
    %c0_10 = arith.constant 0 : index
    %4 = vector.load %arg8[%c0_9, %c0_10] : memref<32x32xf32, #tpu.memory_space<vmem>>, vector<32x32xf32>
    %c0_11 = arith.constant 0 : index
    %c0_12 = arith.constant 0 : index
    %5 = vector.load %arg5[%c0_11, %c0_12] : memref<1x128xf32, #tpu.memory_space<vmem>>, vector<1x128xf32>
    %c0_13 = arith.constant 0 : index
    %c0_14 = arith.constant 0 : index
    %6 = vector.load %arg7[%c0_13, %c0_14] : memref<1x128xf32, #tpu.memory_space<vmem>>, vector<1x128xf32>
    %c0_15 = arith.constant 0 : index
    %c0_16 = arith.constant 0 : index
    %7 = vector.load %arg3[%c0_15, %c0_16] : memref<128x32xf32, #tpu.memory_space<vmem>>, vector<128x32xf32>
    %cst = arith.constant dense<0.000000e+00> : vector<128x128xf32>
    %8 = tpu.matmul %7, %2, %cst {dimension_numbers = #tpu.dot_dimension_numbers<[1], [0], [0], [1], [0, 0, 1, 1], [], []>} : vector<128x32xf32>, vector<32x128xf32>, vector<128x128xf32> -> vector<128x128xf32>
    %9 = vector.broadcast %5 : vector<1x128xf32> to vector<128x128xf32>
    %10 = arith.addf %8, %9 : vector<128x128xf32>
    %11 = vector.extract_strided_slice %10 {offsets = [0, 0], sizes = [128, 32], strides = [1, 1]} : vector<128x128xf32> to vector<128x32xf32>
    %12 = vector.shape_cast %11 : vector<128x32xf32> to vector<1x128x32xf32>
    %13 = vector.extract_strided_slice %10 {offsets = [0, 32], sizes = [128, 32], strides = [1, 1]} : vector<128x128xf32> to vector<128x32xf32>
    %14 = vector.shape_cast %13 : vector<128x32xf32> to vector<1x128x32xf32>
    "tpu.trace_start"() <{level = 10 : i32, message = "gij,gjd->gid"}> : () -> ()
    %cst_17 = arith.constant dense<0.000000e+00> : vector<1x128x32xf32>
    %15 = tpu.matmul %0, %12, %cst_17 {dimension_numbers = #tpu.dot_dimension_numbers<[2], [1], [1], [2], [0, 0, 0, 1, 1, 2], [0], [0]>} : vector<1x128x128xf32>, vector<1x128x32xf32>, vector<1x128x32xf32> -> vector<1x128x32xf32>
    %cst_18 = arith.constant dense<0.000000e+00> : vector<1x128x32xf32>
    %16 = tpu.matmul %1, %14, %cst_18 {dimension_numbers = #tpu.dot_dimension_numbers<[2], [1], [1], [2], [0, 0, 0, 1, 1, 2], [0], [0]>} : vector<1x128x128xf32>, vector<1x128x32xf32>, vector<1x128x32xf32> -> vector<1x128x32xf32>
    "tpu.trace_stop"() : () -> ()
    %17 = tpu.concatenate %15, %16 in 2 : vector<1x128x32xf32>, vector<1x128x32xf32> -> vector<1x128x64xf32>
    %18 = vector.shape_cast %17 : vector<1x128x64xf32> to vector<128x64xf32>
    %cst_19 = arith.constant dense<0.000000e+00> : vector<128x128xf32>
    %19 = tpu.matmul %18, %3, %cst_19 {dimension_numbers = #tpu.dot_dimension_numbers<[1], [0], [0], [1], [0, 0, 1, 1], [], []>} : vector<128x64xf32>, vector<64x128xf32>, vector<128x128xf32> -> vector<128x128xf32>
    %20 = vector.broadcast %6 : vector<1x128xf32> to vector<128x128xf32>
    %21 = arith.addf %19, %20 : vector<128x128xf32>
    %22 = vector.extract_strided_slice %21 {offsets = [0, 0], sizes = [128, 64], strides = [1, 1]} : vector<128x128xf32> to vector<128x64xf32>
    %23 = vector.extract_strided_slice %10 {offsets = [0, 64], sizes = [128, 64], strides = [1, 1]} : vector<128x128xf32> to vector<128x64xf32>
    %24 = arith.addf %22, %23 : vector<128x64xf32>
    %25 = arith.negf %24 : vector<128x64xf32>
    %26 = math.exp %25 : vector<128x64xf32>
    %cst_20 = arith.constant 1.000000e+00 : f32
    %27 = vector.broadcast %cst_20 : f32 to vector<128x64xf32>
    %28 = arith.addf %27, %26 : vector<128x64xf32>
    %29 = arith.divf %27, %28 : vector<128x64xf32>
    %30 = vector.extract_strided_slice %29 {offsets = [0, 0], sizes = [128, 32], strides = [1, 1]} : vector<128x64xf32> to vector<128x32xf32>
    %31 = vector.extract_strided_slice %29 {offsets = [0, 32], sizes = [128, 32], strides = [1, 1]} : vector<128x64xf32> to vector<128x32xf32>
    %32 = vector.extract_strided_slice %21 {offsets = [0, 64], sizes = [128, 32], strides = [1, 1]} : vector<128x128xf32> to vector<128x32xf32>
    %33 = arith.mulf %31, %7 : vector<128x32xf32>
    %cst_21 = arith.constant dense<0.000000e+00> : vector<128x32xf32>
    %34 = tpu.matmul %33, %4, %cst_21 {dimension_numbers = #tpu.dot_dimension_numbers<[1], [0], [0], [1], [0, 0, 1, 1], [], []>} : vector<128x32xf32>, vector<32x32xf32>, vector<128x32xf32> -> vector<128x32xf32>
    %35 = arith.addf %32, %34 : vector<128x32xf32>
    %36 = math.tanh %35 : vector<128x32xf32>
    %37 = arith.subf %36, %7 : vector<128x32xf32>
    %38 = arith.mulf %30, %37 : vector<128x32xf32>
    %39 = arith.addf %7, %38 : vector<128x32xf32>
    %cst_22 = arith.constant dense<0.000000e+00> : vector<128x128xf32>
    %40 = tpu.matmul %39, %2, %cst_22 {dimension_numbers = #tpu.dot_dimension_numbers<[1], [0], [0], [1], [0, 0, 1, 1], [], []>} : vector<128x32xf32>, vector<32x128xf32>, vector<128x128xf32> -> vector<128x128xf32>
    %41 = vector.broadcast %5 : vector<1x128xf32> to vector<128x128xf32>
    %42 = arith.addf %40, %41 : vector<128x128xf32>
    %43 = vector.extract_strided_slice %42 {offsets = [0, 0], sizes = [128, 32], strides = [1, 1]} : vector<128x128xf32> to vector<128x32xf32>
    %44 = vector.shape_cast %43 : vector<128x32xf32> to vector<1x128x32xf32>
    %45 = vector.extract_strided_slice %42 {offsets = [0, 32], sizes = [128, 32], strides = [1, 1]} : vector<128x128xf32> to vector<128x32xf32>
    %46 = vector.shape_cast %45 : vector<128x32xf32> to vector<1x128x32xf32>
    "tpu.trace_start"() <{level = 10 : i32, message = "gij,gjd->gid"}> : () -> ()
    %cst_23 = arith.constant dense<0.000000e+00> : vector<1x128x32xf32>
    %47 = tpu.matmul %0, %44, %cst_23 {dimension_numbers = #tpu.dot_dimension_numbers<[2], [1], [1], [2], [0, 0, 0, 1, 1, 2], [0], [0]>} : vector<1x128x128xf32>, vector<1x128x32xf32>, vector<1x128x32xf32> -> vector<1x128x32xf32>
    %cst_24 = arith.constant dense<0.000000e+00> : vector<1x128x32xf32>
    %48 = tpu.matmul %1, %46, %cst_24 {dimension_numbers = #tpu.dot_dimension_numbers<[2], [1], [1], [2], [0, 0, 0, 1, 1, 2], [0], [0]>} : vector<1x128x128xf32>, vector<1x128x32xf32>, vector<1x128x32xf32> -> vector<1x128x32xf32>
    "tpu.trace_stop"() : () -> ()
    %49 = tpu.concatenate %47, %48 in 2 : vector<1x128x32xf32>, vector<1x128x32xf32> -> vector<1x128x64xf32>
    %50 = vector.shape_cast %49 : vector<1x128x64xf32> to vector<128x64xf32>
    %cst_25 = arith.constant dense<0.000000e+00> : vector<128x128xf32>
    %51 = tpu.matmul %50, %3, %cst_25 {dimension_numbers = #tpu.dot_dimension_numbers<[1], [0], [0], [1], [0, 0, 1, 1], [], []>} : vector<128x64xf32>, vector<64x128xf32>, vector<128x128xf32> -> vector<128x128xf32>
    %52 = vector.broadcast %6 : vector<1x128xf32> to vector<128x128xf32>
    %53 = arith.addf %51, %52 : vector<128x128xf32>
    %54 = vector.extract_strided_slice %53 {offsets = [0, 0], sizes = [128, 64], strides = [1, 1]} : vector<128x128xf32> to vector<128x64xf32>
    %55 = vector.extract_strided_slice %42 {offsets = [0, 64], sizes = [128, 64], strides = [1, 1]} : vector<128x128xf32> to vector<128x64xf32>
    %56 = arith.addf %54, %55 : vector<128x64xf32>
    %57 = arith.negf %56 : vector<128x64xf32>
    %58 = math.exp %57 : vector<128x64xf32>
    %cst_26 = arith.constant 1.000000e+00 : f32
    %59 = vector.broadcast %cst_26 : f32 to vector<128x64xf32>
    %60 = arith.addf %59, %58 : vector<128x64xf32>
    %61 = arith.divf %59, %60 : vector<128x64xf32>
    %62 = vector.extract_strided_slice %61 {offsets = [0, 0], sizes = [128, 32], strides = [1, 1]} : vector<128x64xf32> to vector<128x32xf32>
    %63 = vector.extract_strided_slice %61 {offsets = [0, 32], sizes = [128, 32], strides = [1, 1]} : vector<128x64xf32> to vector<128x32xf32>
    %64 = vector.extract_strided_slice %53 {offsets = [0, 64], sizes = [128, 32], strides = [1, 1]} : vector<128x128xf32> to vector<128x32xf32>
    %65 = arith.mulf %63, %39 : vector<128x32xf32>
    %cst_27 = arith.constant dense<0.000000e+00> : vector<128x32xf32>
    %66 = tpu.matmul %65, %4, %cst_27 {dimension_numbers = #tpu.dot_dimension_numbers<[1], [0], [0], [1], [0, 0, 1, 1], [], []>} : vector<128x32xf32>, vector<32x32xf32>, vector<128x32xf32> -> vector<128x32xf32>
    %67 = arith.addf %64, %66 : vector<128x32xf32>
    %68 = math.tanh %67 : vector<128x32xf32>
    %69 = arith.subf %68, %39 : vector<128x32xf32>
    %70 = arith.mulf %62, %69 : vector<128x32xf32>
    %71 = arith.addf %39, %70 : vector<128x32xf32>
    %c0_28 = arith.constant 0 : index
    %c0_29 = arith.constant 0 : index
    %72 = vector.load %arg9[%c0_28, %c0_29] : memref<128x32xf32, #tpu.memory_space<vmem>>, vector<128x32xf32>
    tpu.vector_store %arg9[%c0_28, %c0_29], %71 {strides = array<i32>} : memref<128x32xf32, #tpu.memory_space<vmem>>, vector<128x32xf32>,
    return
  }
  func.func @transform_0(%arg0: i32) -> (i32, i32, i32) {
    %c0_i32 = arith.constant 0 : i32
    %c0_i32_0 = arith.constant 0 : i32
    %c0_i32_1 = arith.constant 0 : i32
    return %arg0, %c0_i32, %c0_i32_0 : i32, i32, i32
  }
  func.func @transform_1(%arg0: i32) -> (i32, i32, i32) {
    %c0_i32 = arith.constant 0 : i32
    %c0_i32_0 = arith.constant 0 : i32
    %c0_i32_1 = arith.constant 0 : i32
    return %arg0, %c0_i32, %c0_i32_0 : i32, i32, i32
  }
  func.func @transform_2(%arg0: i32) -> (i32, i32) {
    %c0_i32 = arith.constant 0 : i32
    %c0_i32_0 = arith.constant 0 : i32
    return %arg0, %c0_i32 : i32, i32
  }
  func.func @transform_3(%arg0: i32) -> (i32, i32) {
    %c0_i32 = arith.constant 0 : i32
    %c0_i32_0 = arith.constant 0 : i32
    %c0_i32_1 = arith.constant 0 : i32
    return %c0_i32, %c0_i32_0 : i32, i32
  }
  func.func @transform_4(%arg0: i32) -> (i32, i32) {
    %c0_i32 = arith.constant 0 : i32
    %c0_i32_0 = arith.constant 0 : i32
    %c0_i32_1 = arith.constant 0 : i32
    return %c0_i32, %c0_i32_0 : i32, i32
  }
  func.func @transform_5(%arg0: i32) -> (i32, i32) {
    %c0_i32 = arith.constant 0 : i32
    %c0_i32_0 = arith.constant 0 : i32
    %c0_i32_1 = arith.constant 0 : i32
    return %c0_i32, %c0_i32_0 : i32, i32
  }
  func.func @transform_6(%arg0: i32) -> (i32, i32) {
    %c0_i32 = arith.constant 0 : i32
    %c0_i32_0 = arith.constant 0 : i32
    %c0_i32_1 = arith.constant 0 : i32
    return %c0_i32, %c0_i32_0 : i32, i32
  }
  func.func @transform_7(%arg0: i32) -> (i32, i32) {
    %c0_i32 = arith.constant 0 : i32
    %c0_i32_0 = arith.constant 0 : i32
    %c0_i32_1 = arith.constant 0 : i32
    return %c0_i32, %c0_i32_0 : i32, i32
  }
  func.func @transform_8(%arg0: i32) -> (i32, i32) {
    %c0_i32 = arith.constant 0 : i32
    %c0_i32_0 = arith.constant 0 : i32
    return %arg0, %c0_i32 : i32, i32
  }
}

</mosaic_0001>

<llo_original>
// kernel: tpu_custom_call.1
$region0: #{tpu_custom_call.1}
  #allocation0 [shape = 'u32[]', space=smem, size = 0x4, offset = 0x4, fixed_abs, tag = 'smem constant byte address 0x4 - core index']
  #allocation1 [shape = 'u32[72,128]{1,0:T(1,128)}', space=vmem, size = 0x9000, scoped, tag = 'internal scratch']
  %s0 = inlined_call_operand.vmem [shape: f32[1,128,128], index: 0, kind: input, shape index: {}]
  %s1 = inlined_call_operand.hbm [shape: f32[1,128,128], index: 1, kind: input, shape index: {}]
  %s2 = inlined_call_operand.vmem [shape: f32[128,32], index: 2, kind: input, shape index: {}, may-alias: {2,8}]
  %s3 = inlined_call_operand.vmem [shape: f32[32,128], index: 3, kind: input, shape index: {}]
  %s4 = inlined_call_operand.vmem [shape: f32[1,128], index: 4, kind: input, shape index: {}]
  %s5 = inlined_call_operand.hbm [shape: f32[64,128], index: 5, kind: input, shape index: {}]
  %s6 = inlined_call_operand.vmem [shape: f32[1,128], index: 6, kind: input, shape index: {}]
  %s7 = inlined_call_operand.hbm [shape: f32[32,32], index: 7, kind: input, shape index: {}]
  %s8 = inlined_call_operand.vmem [shape: f32[128,32], index: 8, kind: output, shape index: {}, may-alias: {2,8}]
  %s9 = sld [smem:[#allocation0]]
  $region54: #{tpu_custom_call.1} parent=0
    _
  %s11 = ssub.s32 1, %s9
  %s12 = scalar_select 0, %s11, %s9
  $region1: #{tpu_custom_call.1} parent=0
    #allocation2 [shape = 'u8[65536]{0}', space=vmem, size = 0x10000, scoped, tag = 'input window, operand 1, single buffered']
    #allocation3 [shape = 's32[1]{0}', space=sflag, size = 0x4, scoped, tag = 'scoped memory for tpu_custom_call.1']
    #allocation4 [shape = 'u8[32768]{0}', space=vmem, size = 0x8000, scoped, tag = 'input window, operand 5, single buffered']
    #allocation5 [shape = 's32[1]{0}', space=sflag, size = 0x4, scoped, tag = 'scoped memory for tpu_custom_call.1']
    #allocation6 [shape = 'u8[16384]{0}', space=vmem, size = 0x4000, scoped, tag = 'input window, operand 7, single buffered']
    %13 = vsyncpa [#allocation3], 0
    %14 = vsyncpa [#allocation5], 0
    // Predicated region
    $region2: #{tpu_custom_call.1} parent=1 // pred_check
      _
    $region3: #{tpu_custom_call.1} parent=1 // pred_check_branch
      %16 = sbr.rel (0) target = $region5
    $region4: #{tpu_custom_call.1} parent=1 // pred_region
      _
    $region5: #{tpu_custom_call.1} parent=1 // pred_fallthru
      _
    // Predicated region
    $region6: #{tpu_custom_call.1} parent=1 // pred_check
      _
    $region7: #{tpu_custom_call.1} parent=1 // pred_check_branch
      %18 = sbr.rel (0) target = $region9
    $region8: #{tpu_custom_call.1} parent=1 // pred_region
      %20 = vsyncadd [#allocation3], 0
      %s21 = sshll.u32 %s1, 4
      %s22 = int_to_ptr.hbm [resolvable:$true] %s21
      %s23 = sshll.u32 [#allocation2], 4
      %s24 = int_to_ptr.vmem [resolvable:$true] %s23
      %29 = dma.hbm_to_vmem [thread:$0]  %s22, 2048, %s24, [#allocation3], 128, 128, 8
    $region9: #{tpu_custom_call.1} parent=1 // pred_fallthru
      _
    // Predicated region
    $region10: #{tpu_custom_call.1} parent=1 // pred_check
      _
    $region11: #{tpu_custom_call.1} parent=1 // pred_check_branch
      %31 = sbr.rel (0) target = $region13
    $region12: #{tpu_custom_call.1} parent=1 // pred_region
      _
    $region13: #{tpu_custom_call.1} parent=1 // pred_fallthru
      _
    // Predicated region
    $region14: #{tpu_custom_call.1} parent=1 // pred_check
      _
    $region15: #{tpu_custom_call.1} parent=1 // pred_check_branch
      %33 = sbr.rel (0) target = $region17
    $region16: #{tpu_custom_call.1} parent=1 // pred_region
      _
    $region17: #{tpu_custom_call.1} parent=1 // pred_fallthru
      _
    // Predicated region
    $region18: #{tpu_custom_call.1} parent=1 // pred_check
      _
    $region19: #{tpu_custom_call.1} parent=1 // pred_check_branch
      %35 = sbr.rel (0) target = $region21
    $region20: #{tpu_custom_call.1} parent=1 // pred_region
      _
    $region21: #{tpu_custom_call.1} parent=1 // pred_fallthru
      _
    // Predicated region
    $region22: #{tpu_custom_call.1} parent=1 // pred_check
      _
    $region23: #{tpu_custom_call.1} parent=1 // pred_check_branch
      %37 = sbr.rel (0) target = $region25
    $region24: #{tpu_custom_call.1} parent=1 // pred_region
      %39 = vsyncadd [#allocation5], 0
      %s40 = sshll.u32 %s5, 4
      %s41 = int_to_ptr.hbm [resolvable:$true] %s40
      %s42 = sshll.u32 [#allocation4], 4
      %s43 = int_to_ptr.vmem [resolvable:$true] %s42
      %48 = dma.hbm_to_vmem [thread:$0]  %s41, 1024, %s43, [#allocation5], 128, 128, 8
    $region25: #{tpu_custom_call.1} parent=1 // pred_fallthru
      _
    // Predicated region
    $region26: #{tpu_custom_call.1} parent=1 // pred_check
      _
    $region27: #{tpu_custom_call.1} parent=1 // pred_check_branch
      %50 = sbr.rel (0) target = $region29
    $region28: #{tpu_custom_call.1} parent=1 // pred_region
      _
    $region29: #{tpu_custom_call.1} parent=1 // pred_fallthru
      _
    // Predicated region
    $region30: #{tpu_custom_call.1} parent=1 // pred_check
      _
    $region31: #{tpu_custom_call.1} parent=1 // pred_check_branch
      %52 = sbr.rel (0) target = $region33
    $region32: #{tpu_custom_call.1} parent=1 // pred_region
      %54 = vsyncadd [#allocation5], 0
      %s55 = sshll.u32 %s7, 4
      %s56 = int_to_ptr.hbm [resolvable:$true] %s55
      %s57 = sshll.u32 [#allocation6], 4
      %s58 = int_to_ptr.vmem [resolvable:$true] %s57
      %63 = dma.hbm_to_vmem [thread:$0]  %s56, 512, %s58, [#allocation5], 128, 128, 8
    $region33: #{tpu_custom_call.1} parent=1 // pred_fallthru
      _
    // Predicated region
    $region34: #{tpu_custom_call.1} parent=1 // pred_check
      _
    $region35: #{tpu_custom_call.1} parent=1 // pred_check_branch
      %65 = sbr.rel (0) target = $region37
    $region36: #{tpu_custom_call.1} parent=1 // pred_region
      %67 = dma.done [#allocation3], 2048
    $region37: #{tpu_custom_call.1} parent=1 // pred_fallthru
      _
    // Predicated region
    $region38: #{tpu_custom_call.1} parent=1 // pred_check
      _
    $region39: #{tpu_custom_call.1} parent=1 // pred_check_branch
      %69 = sbr.rel (0) target = $region41
    $region40: #{tpu_custom_call.1} parent=1 // pred_region
      %71 = dma.done [#allocation5], 1024
    $region41: #{tpu_custom_call.1} parent=1 // pred_fallthru
      _
    // Predicated region
    $region42: #{tpu_custom_call.1} parent=1 // pred_check
      _
    $region43: #{tpu_custom_call.1} parent=1 // pred_check_branch
      %73 = sbr.rel (0) target = $region45
    $region44: #{tpu_custom_call.1} parent=1 // pred_region
      %75 = dma.done [#allocation5], 512
    $region45: #{tpu_custom_call.1} parent=1 // pred_fallthru
      _
    %v76 = vld [vmem:[%s0] sm:$0xff]
    %v77 = vld [vmem:[%s0 + $0x8] sm:$0xff]
    %v78 = vld [vmem:[%s0 + $0x10] sm:$0xff]
    %v79 = vld [vmem:[%s0 + $0x18] sm:$0xff]
    %v80 = vld [vmem:[%s0 + $0x20] sm:$0xff]
    %v81 = vld [vmem:[%s0 + $0x28] sm:$0xff]
    %v82 = vld [vmem:[%s0 + $0x30] sm:$0xff]
    %v83 = vld [vmem:[%s0 + $0x38] sm:$0xff]
    %v84 = vld [vmem:[%s0 + $0x40] sm:$0xff]
    %v85 = vld [vmem:[%s0 + $0x48] sm:$0xff]
    %v86 = vld [vmem:[%s0 + $0x50] sm:$0xff]
    %v87 = vld [vmem:[%s0 + $0x58] sm:$0xff]
    %v88 = vld [vmem:[%s0 + $0x60] sm:$0xff]
    %v89 = vld [vmem:[%s0 + $0x68] sm:$0xff]
    %v90 = vld [vmem:[%s0 + $0x70] sm:$0xff]
    %v91 = vld [vmem:[%s0 + $0x78] sm:$0xff]
    %v92 = vld [vmem:[#allocation2] sm:$0xff]
    %v93 = vld [vmem:[#allocation2 + $0x8] sm:$0xff]
    %v94 = vld [vmem:[#allocation2 + $0x10] sm:$0xff]
    %v95 = vld [vmem:[#allocation2 + $0x18] sm:$0xff]
    %v96 = vld [vmem:[#allocation2 + $0x20] sm:$0xff]
    %v97 = vld [vmem:[#allocation2 + $0x28] sm:$0xff]
    %v98 = vld [vmem:[#allocation2 + $0x30] sm:$0xff]
    %v99 = vld [vmem:[#allocation2 + $0x38] sm:$0xff]
    %v100 = vld [vmem:[#allocation2 + $0x40] sm:$0xff]
    %v101 = vld [vmem:[#allocation2 + $0x48] sm:$0xff]
    %v102 = vld [vmem:[#allocation2 + $0x50] sm:$0xff]
    %v103 = vld [vmem:[#allocation2 + $0x58] sm:$0xff]
    %v104 = vld [vmem:[#allocation2 + $0x60] sm:$0xff]
    %v105 = vld [vmem:[#allocation2 + $0x68] sm:$0xff]
    %v106 = vld [vmem:[#allocation2 + $0x70] sm:$0xff]
    %v107 = vld [vmem:[#allocation2 + $0x78] sm:$0xff]
    %v108 = vld [vmem:[%s3] sm:$0xff]
    %v109 = vld [vmem:[%s3 + $0x8] sm:$0xff]
    %v110 = vld [vmem:[%s3 + $0x10] sm:$0xff]
    %v111 = vld [vmem:[%s3 + $0x18] sm:$0xff]
    %v112 = vld [vmem:[#allocation4] sm:$0xff]
    %v113 = vld [vmem:[#allocation4 + $0x8] sm:$0xff]
    %v114 = vld [vmem:[#allocation4 + $0x10] sm:$0xff]
    %v115 = vld [vmem:[#allocation4 + $0x18] sm:$0xff]
    %v116 = vld [vmem:[#allocation4 + $0x20] sm:$0xff]
    %v117 = vld [vmem:[#allocation4 + $0x28] sm:$0xff]
    %v118 = vld [vmem:[#allocation4 + $0x30] sm:$0xff]
    %v119 = vld [vmem:[#allocation4 + $0x38] sm:$0xff]
    %v120 = vld [vmem:[#allocation6] sm:$0xff]
    %v121 = vld [vmem:[#allocation6 + $0x8] sm:$0xff]
    %v122 = vld [vmem:[#allocation6 + $0x10] sm:$0xff]
    %v123 = vld [vmem:[#allocation6 + $0x18] sm:$0xff]
    %v124 = vld [vmem:[%s4] sm:$0x1]
    %v125 = vld [vmem:[%s6] sm:$0x1]
    %v126 = vld [vmem:[%s2] sm:$0xff]
    %v127 = vld [vmem:[%s2 + $0x8] sm:$0xff]
    %v128 = vld [vmem:[%s2 + $0x10] sm:$0xff]
    %v129 = vld [vmem:[%s2 + $0x18] sm:$0xff]
    %v130 = vld [vmem:[%s2 + $0x20] sm:$0xff]
    %v131 = vld [vmem:[%s2 + $0x28] sm:$0xff]
    %v132 = vld [vmem:[%s2 + $0x30] sm:$0xff]
    %v133 = vld [vmem:[%s2 + $0x38] sm:$0xff]
    %v134 = vld [vmem:[%s2 + $0x40] sm:$0xff]
    %v135 = vld [vmem:[%s2 + $0x48] sm:$0xff]
    %v136 = vld [vmem:[%s2 + $0x50] sm:$0xff]
    %v137 = vld [vmem:[%s2 + $0x58] sm:$0xff]
    %v138 = vld [vmem:[%s2 + $0x60] sm:$0xff]
    %v139 = vld [vmem:[%s2 + $0x68] sm:$0xff]
    %v140 = vld [vmem:[%s2 + $0x70] sm:$0xff]
    %v141 = vld [vmem:[%s2 + $0x78] sm:$0xff]
    %v143 = vperm.slane %v124, 0
    %vm145 = vcmask 261120
    %v147 = vsel %vm145, %v126, 0
    %v150 = vsel %vm145, %v127, 0
    %v153 = vsel %vm145, %v128, 0
    %v156 = vsel %vm145, %v129, 0
    %v159 = vsel %vm145, %v130, 0
    %v162 = vsel %vm145, %v131, 0
    %v165 = vsel %vm145, %v132, 0
    %v168 = vsel %vm145, %v133, 0
    %v171 = vsel %vm145, %v134, 0
    %v174 = vsel %vm145, %v135, 0
    %v177 = vsel %vm145, %v136, 0
    %v180 = vsel %vm145, %v137, 0
    %v183 = vsel %vm145, %v138, 0
    %v186 = vsel %vm145, %v139, 0
    %v189 = vsel %vm145, %v140, 0
    %v192 = vsel %vm145, %v141, 0
    %194 = vmatpush.msra.mxu0 0.0
    %195 = vmatpush.msra.mxu0 0.0
    %196 = vmatpush.msra.mxu0 0.0
    %197 = vmatpush.msra.mxu0 0.0
    %198 = vmatpush.msra.mxu0 0.0
    %199 = vmatpush.msra.mxu0 0.0
    %200 = vmatpush.msra.mxu0 0.0
    %201 = vmatpush.msra.mxu0 0.0
    %202 = vmatpush.msra.mxu0 0.0
    %203 = vmatpush.msra.mxu0 0.0
    %204 = vmatpush.msra.mxu0 0.0
    %205 = vmatpush.msra.mxu0 0.0
    %206 = vmatpush.msra.mxu0 %v111
    %207 = vmatpush.msra.mxu0 %v110
    %208 = vmatpush.msra.mxu0 %v109
    %209 = vmatpush.msra.mxu0 %v108
    %210 = vmatmul.f32.gmra.mxu0 %v147
    %v211 = vpop.f32.mrf.mxu0
    %v212 = vadd.f32 %v143, %v211
    %213 = vmatmul.f32.gmra.mxu0 %v150
    %v214 = vpop.f32.mrf.mxu0
    %v215 = vadd.f32 %v143, %v214
    %216 = vmatmul.f32.gmra.mxu0 %v153
    %v217 = vpop.f32.mrf.mxu0
    %v218 = vadd.f32 %v143, %v217
    %219 = vmatmul.f32.gmra.mxu0 %v156
    %v220 = vpop.f32.mrf.mxu0
    %v221 = vadd.f32 %v143, %v220
    %222 = vmatmul.f32.gmra.mxu0 %v159
    %v223 = vpop.f32.mrf.mxu0
    %v224 = vadd.f32 %v143, %v223
    %225 = vmatmul.f32.gmra.mxu0 %v162
    %v226 = vpop.f32.mrf.mxu0
    %v227 = vadd.f32 %v143, %v226
    %228 = vmatmul.f32.gmra.mxu0 %v165
    %v229 = vpop.f32.mrf.mxu0
    %v230 = vadd.f32 %v143, %v229
    %231 = vmatmul.f32.gmra.mxu0 %v168
    %v232 = vpop.f32.mrf.mxu0
    %v233 = vadd.f32 %v143, %v232
    %234 = vmatmul.f32.gmra.mxu0 %v171
    %v235 = vpop.f32.mrf.mxu0
    %v236 = vadd.f32 %v143, %v235
    %237 = vmatmul.f32.gmra.mxu0 %v174
    %v238 = vpop.f32.mrf.mxu0
    %v239 = vadd.f32 %v143, %v238
    %240 = vmatmul.f32.gmra.mxu0 %v177
    %v241 = vpop.f32.mrf.mxu0
    %v242 = vadd.f32 %v143, %v241
    %243 = vmatmul.f32.gmra.mxu0 %v180
    %v244 = vpop.f32.mrf.mxu0
    %v245 = vadd.f32 %v143, %v244
    %246 = vmatmul.f32.gmra.mxu0 %v183
    %v247 = vpop.f32.mrf.mxu0
    %v248 = vadd.f32 %v143, %v247
    %249 = vmatmul.f32.gmra.mxu0 %v186
    %v250 = vpop.f32.mrf.mxu0
    %v251 = vadd.f32 %v143, %v250
    %252 = vmatmul.f32.gmra.mxu0 %v189
    %v253 = vpop.f32.mrf.mxu0
    %v254 = vadd.f32 %v143, %v253
    %255 = vmatmul.f32.gmra.mxu0 %v192
    %v256 = vpop.f32.mrf.mxu0
    %v257 = vadd.f32 %v143, %v256
    %258 = vdwg.mxu0
    %259 = vmatpush.msra.mxu0 %v257
    %260 = vmatpush.msra.mxu0 %v254
    %261 = vmatpush.msra.mxu0 %v251
    %262 = vmatpush.msra.mxu0 %v248
    %263 = vmatpush.msra.mxu0 %v245
    %264 = vmatpush.msra.mxu0 %v242
    %265 = vmatpush.msra.mxu0 %v239
    %266 = vmatpush.msra.mxu0 %v236
    %267 = vmatpush.msra.mxu0 %v233
    %268 = vmatpush.msra.mxu0 %v230
    %269 = vmatpush.msra.mxu0 %v227
    %270 = vmatpush.msra.mxu0 %v224
    %271 = vmatpush.msra.mxu0 %v221
    %272 = vmatpush.msra.mxu0 %v218
    %273 = vmatpush.msra.mxu0 %v215
    %274 = vmatpush.msra.mxu0 %v212
    %275 = vmatmul.f32.gmra.mxu0 %v76
    %v276 = vpop.f32.mrf.mxu0
    %v277 = vadd.f32 0.0, %v276
    %278 = vmatmul.f32.gmra.mxu0 %v77
    %v279 = vpop.f32.mrf.mxu0
    %v280 = vadd.f32 0.0, %v279
    %281 = vmatmul.f32.gmra.mxu0 %v78
    %v282 = vpop.f32.mrf.mxu0
    %v283 = vadd.f32 0.0, %v282
    %284 = vmatmul.f32.gmra.mxu0 %v79
    %v285 = vpop.f32.mrf.mxu0
    %v286 = vadd.f32 0.0, %v285
    %287 = vmatmul.f32.gmra.mxu0 %v80
    %v288 = vpop.f32.mrf.mxu0
    %v289 = vadd.f32 0.0, %v288
    %290 = vmatmul.f32.gmra.mxu0 %v81
    %v291 = vpop.f32.mrf.mxu0
    %v292 = vadd.f32 0.0, %v291
    %293 = vmatmul.f32.gmra.mxu0 %v82
    %v294 = vpop.f32.mrf.mxu0
    %v295 = vadd.f32 0.0, %v294
    %296 = vmatmul.f32.gmra.mxu0 %v83
    %v297 = vpop.f32.mrf.mxu0
    %v298 = vadd.f32 0.0, %v297
    %299 = vmatmul.f32.gmra.mxu0 %v84
    %v300 = vpop.f32.mrf.mxu0
    %v301 = vadd.f32 0.0, %v300
    %302 = vmatmul.f32.gmra.mxu0 %v85
    %v303 = vpop.f32.mrf.mxu0
    %v304 = vadd.f32 0.0, %v303
    %305 = vmatmul.f32.gmra.mxu0 %v86
    %v306 = vpop.f32.mrf.mxu0
    %v307 = vadd.f32 0.0, %v306
    %308 = vmatmul.f32.gmra.mxu0 %v87
    %v309 = vpop.f32.mrf.mxu0
    %v310 = vadd.f32 0.0, %v309
    %311 = vmatmul.f32.gmra.mxu0 %v88
    %v312 = vpop.f32.mrf.mxu0
    %v313 = vadd.f32 0.0, %v312
    %314 = vmatmul.f32.gmra.mxu0 %v89
    %v315 = vpop.f32.mrf.mxu0
    %v316 = vadd.f32 0.0, %v315
    %317 = vmatmul.f32.gmra.mxu0 %v90
    %v318 = vpop.f32.mrf.mxu0
    %v319 = vadd.f32 0.0, %v318
    %320 = vmatmul.f32.gmra.mxu0 %v91
    %v321 = vpop.f32.mrf.mxu0
    %v322 = vadd.f32 0.0, %v321
    %323 = vdwg.mxu0
    %340 = vrot.lane.b32.xlu0 %v212, 96
    %v341 = vpop.permute.xlu0 %340
    %342 = vrot.lane.b32.xlu0 %v215, 96
    %v343 = vpop.permute.xlu0 %342
    %344 = vrot.lane.b32.xlu0 %v218, 96
    %v345 = vpop.permute.xlu0 %344
    %346 = vrot.lane.b32.xlu0 %v221, 96
    %v347 = vpop.permute.xlu0 %346
    %348 = vrot.lane.b32.xlu0 %v224, 96
    %v349 = vpop.permute.xlu0 %348
    %350 = vrot.lane.b32.xlu0 %v227, 96
    %v351 = vpop.permute.xlu0 %350
    %352 = vrot.lane.b32.xlu0 %v230, 96
    %v353 = vpop.permute.xlu0 %352
    %354 = vrot.lane.b32.xlu0 %v233, 96
    %v355 = vpop.permute.xlu0 %354
    %356 = vrot.lane.b32.xlu0 %v236, 96
    %v357 = vpop.permute.xlu0 %356
    %358 = vrot.lane.b32.xlu0 %v239, 96
    %v359 = vpop.permute.xlu0 %358
    %360 = vrot.lane.b32.xlu0 %v242, 96
    %v361 = vpop.permute.xlu0 %360
    %362 = vrot.lane.b32.xlu0 %v245, 96
    %v363 = vpop.permute.xlu0 %362
    %364 = vrot.lane.b32.xlu0 %v248, 96
    %v365 = vpop.permute.xlu0 %364
    %366 = vrot.lane.b32.xlu0 %v251, 96
    %v367 = vpop.permute.xlu0 %366
    %368 = vrot.lane.b32.xlu0 %v254, 96
    %v369 = vpop.permute.xlu0 %368
    %370 = vrot.lane.b32.xlu0 %v257, 96
    %v371 = vpop.permute.xlu0 %370
    %388 = vmatpush.msra.mxu0 %v371
    %389 = vmatpush.msra.mxu0 %v369
    %390 = vmatpush.msra.mxu0 %v367
    %391 = vmatpush.msra.mxu0 %v365
    %392 = vmatpush.msra.mxu0 %v363
    %393 = vmatpush.msra.mxu0 %v361
    %394 = vmatpush.msra.mxu0 %v359
    %395 = vmatpush.msra.mxu0 %v357
    %396 = vmatpush.msra.mxu0 %v355
    %397 = vmatpush.msra.mxu0 %v353
    %398 = vmatpush.msra.mxu0 %v351
    %399 = vmatpush.msra.mxu0 %v349
    %400 = vmatpush.msra.mxu0 %v347
    %401 = vmatpush.msra.mxu0 %v345
    %402 = vmatpush.msra.mxu0 %v343
    %403 = vmatpush.msra.mxu0 %v341
    %404 = vmatmul.f32.gmra.mxu0 %v92
    %v405 = vpop.f32.mrf.mxu0
    %v406 = vadd.f32 0.0, %v405
    %407 = vmatmul.f32.gmra.mxu0 %v93
    %v408 = vpop.f32.mrf.mxu0
    %v409 = vadd.f32 0.0, %v408
    %410 = vmatmul.f32.gmra.mxu0 %v94
    %v411 = vpop.f32.mrf.mxu0
    %v412 = vadd.f32 0.0, %v411
    %413 = vmatmul.f32.gmra.mxu0 %v95
    %v414 = vpop.f32.mrf.mxu0
    %v415 = vadd.f32 0.0, %v414
    %416 = vmatmul.f32.gmra.mxu0 %v96
    %v417 = vpop.f32.mrf.mxu0
    %v418 = vadd.f32 0.0, %v417
    %419 = vmatmul.f32.gmra.mxu0 %v97
    %v420 = vpop.f32.mrf.mxu0
    %v421 = vadd.f32 0.0, %v420
    %422 = vmatmul.f32.gmra.mxu0 %v98
    %v423 = vpop.f32.mrf.mxu0
    %v424 = vadd.f32 0.0, %v423
    %425 = vmatmul.f32.gmra.mxu0 %v99
    %v426 = vpop.f32.mrf.mxu0
    %v427 = vadd.f32 0.0, %v426
    %428 = vmatmul.f32.gmra.mxu0 %v100
    %v429 = vpop.f32.mrf.mxu0
    %v430 = vadd.f32 0.0, %v429
    %431 = vmatmul.f32.gmra.mxu0 %v101
    %v432 = vpop.f32.mrf.mxu0
    %v433 = vadd.f32 0.0, %v432
    %434 = vmatmul.f32.gmra.mxu0 %v102
    %v435 = vpop.f32.mrf.mxu0
    %v436 = vadd.f32 0.0, %v435
    %437 = vmatmul.f32.gmra.mxu0 %v103
    %v438 = vpop.f32.mrf.mxu0
    %v439 = vadd.f32 0.0, %v438
    %440 = vmatmul.f32.gmra.mxu0 %v104
    %v441 = vpop.f32.mrf.mxu0
    %v442 = vadd.f32 0.0, %v441
    %443 = vmatmul.f32.gmra.mxu0 %v105
    %v444 = vpop.f32.mrf.mxu0
    %v445 = vadd.f32 0.0, %v444
    %446 = vmatmul.f32.gmra.mxu0 %v106
    %v447 = vpop.f32.mrf.mxu0
    %v448 = vadd.f32 0.0, %v447
    %449 = vmatmul.f32.gmra.mxu0 %v107
    %v450 = vpop.f32.mrf.mxu0
    %v451 = vadd.f32 0.0, %v450
    %452 = vdwg.mxu0
    %469 = vrot.lane.b32.xlu0 %v406, 32
    %v470 = vpop.permute.xlu0 %469
    %471 = vrot.lane.b32.xlu0 %v409, 32
    %v472 = vpop.permute.xlu0 %471
    %473 = vrot.lane.b32.xlu0 %v412, 32
    %v474 = vpop.permute.xlu0 %473
    %475 = vrot.lane.b32.xlu0 %v415, 32
    %v476 = vpop.permute.xlu0 %475
    %477 = vrot.lane.b32.xlu0 %v418, 32
    %v478 = vpop.permute.xlu0 %477
    %479 = vrot.lane.b32.xlu0 %v421, 32
    %v480 = vpop.permute.xlu0 %479
    %481 = vrot.lane.b32.xlu0 %v424, 32
    %v482 = vpop.permute.xlu0 %481
    %483 = vrot.lane.b32.xlu0 %v427, 32
    %v484 = vpop.permute.xlu0 %483
    %485 = vrot.lane.b32.xlu0 %v430, 32
    %v486 = vpop.permute.xlu0 %485
    %487 = vrot.lane.b32.xlu0 %v433, 32
    %v488 = vpop.permute.xlu0 %487
    %489 = vrot.lane.b32.xlu0 %v436, 32
    %v490 = vpop.permute.xlu0 %489
    %491 = vrot.lane.b32.xlu0 %v439, 32
    %v492 = vpop.permute.xlu0 %491
    %493 = vrot.lane.b32.xlu0 %v442, 32
    %v494 = vpop.permute.xlu0 %493
    %495 = vrot.lane.b32.xlu0 %v445, 32
    %v496 = vpop.permute.xlu0 %495
    %497 = vrot.lane.b32.xlu0 %v448, 32
    %v498 = vpop.permute.xlu0 %497
    %499 = vrot.lane.b32.xlu0 %v451, 32
    %v500 = vpop.permute.xlu0 %499
    %v517 = vsel %vm145, %v277, %v470
    %v518 = vsel %vm145, %v280, %v472
    %v519 = vsel %vm145, %v283, %v474
    %v520 = vsel %vm145, %v286, %v476
    %v521 = vsel %vm145, %v289, %v478
    %v522 = vsel %vm145, %v292, %v480
    %v523 = vsel %vm145, %v295, %v482
    %v524 = vsel %vm145, %v298, %v484
    %v525 = vsel %vm145, %v301, %v486
    %v526 = vsel %vm145, %v304, %v488
    %v527 = vsel %vm145, %v307, %v490
    %v528 = vsel %vm145, %v310, %v492
    %v529 = vsel %vm145, %v313, %v494
    %v530 = vsel %vm145, %v316, %v496
    %v531 = vsel %vm145, %v319, %v498
    %v532 = vsel %vm145, %v322, %v500
    %v534 = vperm.slane %v125, 0
    %vm536 = vcmask 523264
    %v538 = vsel %vm536, %v517, 0
    %v541 = vsel %vm536, %v518, 0
    %v544 = vsel %vm536, %v519, 0
    %v547 = vsel %vm536, %v520, 0
    %v550 = vsel %vm536, %v521, 0
    %v553 = vsel %vm536, %v522, 0
    %v556 = vsel %vm536, %v523, 0
    %v559 = vsel %vm536, %v524, 0
    %v562 = vsel %vm536, %v525, 0
    %v565 = vsel %vm536, %v526, 0
    %v568 = vsel %vm536, %v527, 0
    %v571 = vsel %vm536, %v528, 0
    %v574 = vsel %vm536, %v529, 0
    %v577 = vsel %vm536, %v530, 0
    %v580 = vsel %vm536, %v531, 0
    %v583 = vsel %vm536, %v532, 0
    %585 = vmatpush.msra.mxu0 0.0
    %586 = vmatpush.msra.mxu0 0.0
    %587 = vmatpush.msra.mxu0 0.0
    %588 = vmatpush.msra.mxu0 0.0
    %589 = vmatpush.msra.mxu0 0.0
    %590 = vmatpush.msra.mxu0 0.0
    %591 = vmatpush.msra.mxu0 0.0
    %592 = vmatpush.msra.mxu0 0.0
    %593 = vmatpush.msra.mxu0 %v119
    %594 = vmatpush.msra.mxu0 %v118
    %595 = vmatpush.msra.mxu0 %v117
    %596 = vmatpush.msra.mxu0 %v116
    %597 = vmatpush.msra.mxu0 %v115
    %598 = vmatpush.msra.mxu0 %v114
    %599 = vmatpush.msra.mxu0 %v113
    %600 = vmatpush.msra.mxu0 %v112
    %601 = vmatmul.f32.gmra.mxu0 %v538
    %v602 = vpop.f32.mrf.mxu0
    %v603 = vadd.f32 %v534, %v602
    %604 = vmatmul.f32.gmra.mxu0 %v541
    %v605 = vpop.f32.mrf.mxu0
    %v606 = vadd.f32 %v534, %v605
    %607 = vmatmul.f32.gmra.mxu0 %v544
    %v608 = vpop.f32.mrf.mxu0
    %v609 = vadd.f32 %v534, %v608
    %610 = vmatmul.f32.gmra.mxu0 %v547
    %v611 = vpop.f32.mrf.mxu0
    %v612 = vadd.f32 %v534, %v611
    %613 = vmatmul.f32.gmra.mxu0 %v550
    %v614 = vpop.f32.mrf.mxu0
    %v615 = vadd.f32 %v534, %v614
    %616 = vmatmul.f32.gmra.mxu0 %v553
    %v617 = vpop.f32.mrf.mxu0
    %v618 = vadd.f32 %v534, %v617
    %619 = vmatmul.f32.gmra.mxu0 %v556
    %v620 = vpop.f32.mrf.mxu0
    %v621 = vadd.f32 %v534, %v620
    %622 = vmatmul.f32.gmra.mxu0 %v559
    %v623 = vpop.f32.mrf.mxu0
    %v624 = vadd.f32 %v534, %v623
    %625 = vmatmul.f32.gmra.mxu0 %v562
    %v626 = vpop.f32.mrf.mxu0
    %v627 = vadd.f32 %v534, %v626
    %628 = vmatmul.f32.gmra.mxu0 %v565
    %v629 = vpop.f32.mrf.mxu0
    %v630 = vadd.f32 %v534, %v629
    %631 = vmatmul.f32.gmra.mxu0 %v568
    %v632 = vpop.f32.mrf.mxu0
    %v633 = vadd.f32 %v534, %v632
    %634 = vmatmul.f32.gmra.mxu0 %v571
    %v635 = vpop.f32.mrf.mxu0
    %v636 = vadd.f32 %v534, %v635
    %637 = vmatmul.f32.gmra.mxu0 %v574
    %v638 = vpop.f32.mrf.mxu0
    %v639 = vadd.f32 %v534, %v638
    %640 = vmatmul.f32.gmra.mxu0 %v577
    %v641 = vpop.f32.mrf.mxu0
    %v642 = vadd.f32 %v534, %v641
    %643 = vmatmul.f32.gmra.mxu0 %v580
    %v644 = vpop.f32.mrf.mxu0
    %v645 = vadd.f32 %v534, %v644
    %646 = vmatmul.f32.gmra.mxu0 %v583
    %v647 = vpop.f32.mrf.mxu0
    %v648 = vadd.f32 %v534, %v647
    %649 = vdwg.mxu0
    %650 = vrot.lane.b32.xlu0 %v212, 64
    %v651 = vpop.permute.xlu0 %650
    %652 = vrot.lane.b32.xlu0 %v215, 64
    %v653 = vpop.permute.xlu0 %652
    %654 = vrot.lane.b32.xlu0 %v218, 64
    %v655 = vpop.permute.xlu0 %654
    %656 = vrot.lane.b32.xlu0 %v221, 64
    %v657 = vpop.permute.xlu0 %656
    %658 = vrot.lane.b32.xlu0 %v224, 64
    %v659 = vpop.permute.xlu0 %658
    %660 = vrot.lane.b32.xlu0 %v227, 64
    %v661 = vpop.permute.xlu0 %660
    %662 = vrot.lane.b32.xlu0 %v230, 64
    %v663 = vpop.permute.xlu0 %662
    %664 = vrot.lane.b32.xlu0 %v233, 64
    %v665 = vpop.permute.xlu0 %664
    %666 = vrot.lane.b32.xlu0 %v236, 64
    %v667 = vpop.permute.xlu0 %666
    %668 = vrot.lane.b32.xlu0 %v239, 64
    %v669 = vpop.permute.xlu0 %668
    %670 = vrot.lane.b32.xlu0 %v242, 64
    %v671 = vpop.permute.xlu0 %670
    %672 = vrot.lane.b32.xlu0 %v245, 64
    %v673 = vpop.permute.xlu0 %672
    %674 = vrot.lane.b32.xlu0 %v248, 64
    %v675 = vpop.permute.xlu0 %674
    %676 = vrot.lane.b32.xlu0 %v251, 64
    %v677 = vpop.permute.xlu0 %676
    %678 = vrot.lane.b32.xlu0 %v254, 64
    %v679 = vpop.permute.xlu0 %678
    %680 = vrot.lane.b32.xlu0 %v257, 64
    %v681 = vpop.permute.xlu0 %680
    %v698 = vadd.f32 %v603, %v651
    %v699 = vadd.f32 %v606, %v653
    %v700 = vadd.f32 %v609, %v655
    %v701 = vadd.f32 %v612, %v657
    %v702 = vadd.f32 %v615, %v659
    %v703 = vadd.f32 %v618, %v661
    %v704 = vadd.f32 %v621, %v663
    %v705 = vadd.f32 %v624, %v665
    %v706 = vadd.f32 %v627, %v667
    %v707 = vadd.f32 %v630, %v669
    %v708 = vadd.f32 %v633, %v671
    %v709 = vadd.f32 %v636, %v673
    %v710 = vadd.f32 %v639, %v675
    %v711 = vadd.f32 %v642, %v677
    %v712 = vadd.f32 %v645, %v679
    %v713 = vadd.f32 %v648, %v681
    %v714 = vxor.u32 %v698, 2147483648
    %v715 = vxor.u32 %v699, 2147483648
    %v716 = vxor.u32 %v700, 2147483648
    %v717 = vxor.u32 %v701, 2147483648
    %v718 = vxor.u32 %v702, 2147483648
    %v719 = vxor.u32 %v703, 2147483648
    %v720 = vxor.u32 %v704, 2147483648
    %v721 = vxor.u32 %v705, 2147483648
    %v722 = vxor.u32 %v706, 2147483648
    %v723 = vxor.u32 %v707, 2147483648
    %v724 = vxor.u32 %v708, 2147483648
    %v725 = vxor.u32 %v709, 2147483648
    %v726 = vxor.u32 %v710, 2147483648
    %v727 = vxor.u32 %v711, 2147483648
    %v728 = vxor.u32 %v712, 2147483648
    %v729 = vxor.u32 %v713, 2147483648
    %v730 = vmul.f32 %v714, 1.442695
    %v731 = vpow.pop %v730
    %v732 = vmul.f32 %v715, 1.442695
    %v733 = vpow.pop %v732
    %v734 = vmul.f32 %v716, 1.442695
    %v735 = vpow.pop %v734
    %v736 = vmul.f32 %v717, 1.442695
    %v737 = vpow.pop %v736
    %v738 = vmul.f32 %v718, 1.442695
    %v739 = vpow.pop %v738
    %v740 = vmul.f32 %v719, 1.442695
    %v741 = vpow.pop %v740
    %v742 = vmul.f32 %v720, 1.442695
    %v743 = vpow.pop %v742
    %v744 = vmul.f32 %v721, 1.442695
    %v745 = vpow.pop %v744
    %v746 = vmul.f32 %v722, 1.442695
    %v747 = vpow.pop %v746
    %v748 = vmul.f32 %v723, 1.442695
    %v749 = vpow.pop %v748
    %v750 = vmul.f32 %v724, 1.442695
    %v751 = vpow.pop %v750
    %v752 = vmul.f32 %v725, 1.442695
    %v753 = vpow.pop %v752
    %v754 = vmul.f32 %v726, 1.442695
    %v755 = vpow.pop %v754
    %v756 = vmul.f32 %v727, 1.442695
    %v757 = vpow.pop %v756
    %v758 = vmul.f32 %v728, 1.442695
    %v759 = vpow.pop %v758
    %v760 = vmul.f32 %v729, 1.442695
    %v761 = vpow.pop %v760
    %v762 = vadd.f32 %v731, 1.0
    %v763 = vadd.f32 %v733, 1.0
    %v764 = vadd.f32 %v735, 1.0
    %v765 = vadd.f32 %v737, 1.0
    %v766 = vadd.f32 %v739, 1.0
    %v767 = vadd.f32 %v741, 1.0
    %v768 = vadd.f32 %v743, 1.0
    %v769 = vadd.f32 %v745, 1.0
    %v770 = vadd.f32 %v747, 1.0
    %v771 = vadd.f32 %v749, 1.0
    %v772 = vadd.f32 %v751, 1.0
    %v773 = vadd.f32 %v753, 1.0
    %v774 = vadd.f32 %v755, 1.0
    %v775 = vadd.f32 %v757, 1.0
    %v776 = vadd.f32 %v759, 1.0
    %v777 = vadd.f32 %v761, 1.0
    %v778 = vrcp.pop %v762
    %v779 = vmul.f32 %v762, %v778
    %v780 = vsub.f32 1.0, %v779
    %v781 = vmul.f32 %v778, %v780
    %v782 = vadd.f32 %v778, %v781
    %vm783 = vweird.f32 %v762
    %vm784 = vweird.f32 %v778
    %vm785 = vmor %vm783, %vm784
    %v786 = vsel %vm785, %v778, %v782
    %v787 = vand.u32 2147483647, %v762
    %vm788 = vcmp.eq.f32.partialorder %v787, 8.507059e+37
    %v789 = vand.u32 %v762, 2147483648
    %v790 = vor.u32 1.1754944e-38, %v789
    %v791 = vsel %vm788, %v790, %v786
    %v792 = vmul.f32 1.0, %v791
    %v793 = vrcp.pop %v763
    %v794 = vmul.f32 %v763, %v793
    %v795 = vsub.f32 1.0, %v794
    %v796 = vmul.f32 %v793, %v795
    %v797 = vadd.f32 %v793, %v796
    %vm798 = vweird.f32 %v763
    %vm799 = vweird.f32 %v793
    %vm800 = vmor %vm798, %vm799
    %v801 = vsel %vm800, %v793, %v797
    %v802 = vand.u32 2147483647, %v763
    %vm803 = vcmp.eq.f32.partialorder %v802, 8.507059e+37
    %v804 = vand.u32 %v763, 2147483648
    %v805 = vor.u32 1.1754944e-38, %v804
    %v806 = vsel %vm803, %v805, %v801
    %v807 = vmul.f32 1.0, %v806
    %v808 = vrcp.pop %v764
    %v809 = vmul.f32 %v764, %v808
    %v810 = vsub.f32 1.0, %v809
    %v811 = vmul.f32 %v808, %v810
    %v812 = vadd.f32 %v808, %v811
    %vm813 = vweird.f32 %v764
    %vm814 = vweird.f32 %v808
    %vm815 = vmor %vm813, %vm814
    %v816 = vsel %vm815, %v808, %v812
    %v817 = vand.u32 2147483647, %v764
    %vm818 = vcmp.eq.f32.partialorder %v817, 8.507059e+37
    %v819 = vand.u32 %v764, 2147483648
    %v820 = vor.u32 1.1754944e-38, %v819
    %v821 = vsel %vm818, %v820, %v816
    %v822 = vmul.f32 1.0, %v821
    %v823 = vrcp.pop %v765
    %v824 = vmul.f32 %v765, %v823
    %v825 = vsub.f32 1.0, %v824
    %v826 = vmul.f32 %v823, %v825
    %v827 = vadd.f32 %v823, %v826
    %vm828 = vweird.f32 %v765
    %vm829 = vweird.f32 %v823
    %vm830 = vmor %vm828, %vm829
    %v831 = vsel %vm830, %v823, %v827
    %v832 = vand.u32 2147483647, %v765
    %vm833 = vcmp.eq.f32.partialorder %v832, 8.507059e+37
    %v834 = vand.u32 %v765, 2147483648
    %v835 = vor.u32 1.1754944e-38, %v834
    %v836 = vsel %vm833, %v835, %v831
    %v837 = vmul.f32 1.0, %v836
    %v838 = vrcp.pop %v766
    %v839 = vmul.f32 %v766, %v838
    %v840 = vsub.f32 1.0, %v839
    %v841 = vmul.f32 %v838, %v840
    %v842 = vadd.f32 %v838, %v841
    %vm843 = vweird.f32 %v766
    %vm844 = vweird.f32 %v838
    %vm845 = vmor %vm843, %vm844
    %v846 = vsel %vm845, %v838, %v842
    %v847 = vand.u32 2147483647, %v766
    %vm848 = vcmp.eq.f32.partialorder %v847, 8.507059e+37
    %v849 = vand.u32 %v766, 2147483648
    %v850 = vor.u32 1.1754944e-38, %v849
    %v851 = vsel %vm848, %v850, %v846
    %v852 = vmul.f32 1.0, %v851
    %v853 = vrcp.pop %v767
    %v854 = vmul.f32 %v767, %v853
    %v855 = vsub.f32 1.0, %v854
    %v856 = vmul.f32 %v853, %v855
    %v857 = vadd.f32 %v853, %v856
    %vm858 = vweird.f32 %v767
    %vm859 = vweird.f32 %v853
    %vm860 = vmor %vm858, %vm859
    %v861 = vsel %vm860, %v853, %v857
    %v862 = vand.u32 2147483647, %v767
    %vm863 = vcmp.eq.f32.partialorder %v862, 8.507059e+37
    %v864 = vand.u32 %v767, 2147483648
    %v865 = vor.u32 1.1754944e-38, %v864
    %v866 = vsel %vm863, %v865, %v861
    %v867 = vmul.f32 1.0, %v866
    %v868 = vrcp.pop %v768
    %v869 = vmul.f32 %v768, %v868
    %v870 = vsub.f32 1.0, %v869
    %v871 = vmul.f32 %v868, %v870
    %v872 = vadd.f32 %v868, %v871
    %vm873 = vweird.f32 %v768
    %vm874 = vweird.f32 %v868
    %vm875 = vmor %vm873, %vm874
    %v876 = vsel %vm875, %v868, %v872
    %v877 = vand.u32 2147483647, %v768
    %vm878 = vcmp.eq.f32.partialorder %v877, 8.507059e+37
    %v879 = vand.u32 %v768, 2147483648
    %v880 = vor.u32 1.1754944e-38, %v879
    %v881 = vsel %vm878, %v880, %v876
    %v882 = vmul.f32 1.0, %v881
    %v883 = vrcp.pop %v769
    %v884 = vmul.f32 %v769, %v883
    %v885 = vsub.f32 1.0, %v884
    %v886 = vmul.f32 %v883, %v885
    %v887 = vadd.f32 %v883, %v886
    %vm888 = vweird.f32 %v769
    %vm889 = vweird.f32 %v883
    %vm890 = vmor %vm888, %vm889
    %v891 = vsel %vm890, %v883, %v887
    %v892 = vand.u32 2147483647, %v769
    %vm893 = vcmp.eq.f32.partialorder %v892, 8.507059e+37
    %v894 = vand.u32 %v769, 2147483648
    %v895 = vor.u32 1.1754944e-38, %v894
    %v896 = vsel %vm893, %v895, %v891
    %v897 = vmul.f32 1.0, %v896
    %v898 = vrcp.pop %v770
    %v899 = vmul.f32 %v770, %v898
    %v900 = vsub.f32 1.0, %v899
    %v901 = vmul.f32 %v898, %v900
    %v902 = vadd.f32 %v898, %v901
    %vm903 = vweird.f32 %v770
    %vm904 = vweird.f32 %v898
    %vm905 = vmor %vm903, %vm904
    %v906 = vsel %vm905, %v898, %v902
    %v907 = vand.u32 2147483647, %v770
    %vm908 = vcmp.eq.f32.partialorder %v907, 8.507059e+37
    %v909 = vand.u32 %v770, 2147483648
    %v910 = vor.u32 1.1754944e-38, %v909
    %v911 = vsel %vm908, %v910, %v906
    %v912 = vmul.f32 1.0, %v911
    %v913 = vrcp.pop %v771
    %v914 = vmul.f32 %v771, %v913
    %v915 = vsub.f32 1.0, %v914
    %v916 = vmul.f32 %v913, %v915
    %v917 = vadd.f32 %v913, %v916
    %vm918 = vweird.f32 %v771
    %vm919 = vweird.f32 %v913
    %vm920 = vmor %vm918, %vm919
    %v921 = vsel %vm920, %v913, %v917
    %v922 = vand.u32 2147483647, %v771
    %vm923 = vcmp.eq.f32.partialorder %v922, 8.507059e+37
    %v924 = vand.u32 %v771, 2147483648
    %v925 = vor.u32 1.1754944e-38, %v924
    %v926 = vsel %vm923, %v925, %v921
    %v927 = vmul.f32 1.0, %v926
    %v928 = vrcp.pop %v772
    %v929 = vmul.f32 %v772, %v928
    %v930 = vsub.f32 1.0, %v929
    %v931 = vmul.f32 %v928, %v930
    %v932 = vadd.f32 %v928, %v931
    %vm933 = vweird.f32 %v772
    %vm934 = vweird.f32 %v928
    %vm935 = vmor %vm933, %vm934
    %v936 = vsel %vm935, %v928, %v932
    %v937 = vand.u32 2147483647, %v772
    %vm938 = vcmp.eq.f32.partialorder %v937, 8.507059e+37
    %v939 = vand.u32 %v772, 2147483648
    %v940 = vor.u32 1.1754944e-38, %v939
    %v941 = vsel %vm938, %v940, %v936
    %v942 = vmul.f32 1.0, %v941
    %v943 = vrcp.pop %v773
    %v944 = vmul.f32 %v773, %v943
    %v945 = vsub.f32 1.0, %v944
    %v946 = vmul.f32 %v943, %v945
    %v947 = vadd.f32 %v943, %v946
    %vm948 = vweird.f32 %v773
    %vm949 = vweird.f32 %v943
    %vm950 = vmor %vm948, %vm949
    %v951 = vsel %vm950, %v943, %v947
    %v952 = vand.u32 2147483647, %v773
    %vm953 = vcmp.eq.f32.partialorder %v952, 8.507059e+37
    %v954 = vand.u32 %v773, 2147483648
    %v955 = vor.u32 1.1754944e-38, %v954
    %v956 = vsel %vm953, %v955, %v951
    %v957 = vmul.f32 1.0, %v956
    %v958 = vrcp.pop %v774
    %v959 = vmul.f32 %v774, %v958
    %v960 = vsub.f32 1.0, %v959
    %v961 = vmul.f32 %v958, %v960
    %v962 = vadd.f32 %v958, %v961
    %vm963 = vweird.f32 %v774
    %vm964 = vweird.f32 %v958
    %vm965 = vmor %vm963, %vm964
    %v966 = vsel %vm965, %v958, %v962
    %v967 = vand.u32 2147483647, %v774
    %vm968 = vcmp.eq.f32.partialorder %v967, 8.507059e+37
    %v969 = vand.u32 %v774, 2147483648
    %v970 = vor.u32 1.1754944e-38, %v969
    %v971 = vsel %vm968, %v970, %v966
    %v972 = vmul.f32 1.0, %v971
    %v973 = vrcp.pop %v775
    %v974 = vmul.f32 %v775, %v973
    %v975 = vsub.f32 1.0, %v974
    %v976 = vmul.f32 %v973, %v975
    %v977 = vadd.f32 %v973, %v976
    %vm978 = vweird.f32 %v775
    %vm979 = vweird.f32 %v973
    %vm980 = vmor %vm978, %vm979
    %v981 = vsel %vm980, %v973, %v977
    %v982 = vand.u32 2147483647, %v775
    %vm983 = vcmp.eq.f32.partialorder %v982, 8.507059e+37
    %v984 = vand.u32 %v775, 2147483648
    %v985 = vor.u32 1.1754944e-38, %v984
    %v986 = vsel %vm983, %v985, %v981
    %v987 = vmul.f32 1.0, %v986
    %v988 = vrcp.pop %v776
    %v989 = vmul.f32 %v776, %v988
    %v990 = vsub.f32 1.0, %v989
    %v991 = vmul.f32 %v988, %v990
    %v992 = vadd.f32 %v988, %v991
    %vm993 = vweird.f32 %v776
    %vm994 = vweird.f32 %v988
    %vm995 = vmor %vm993, %vm994
    %v996 = vsel %vm995, %v988, %v992
    %v997 = vand.u32 2147483647, %v776
    %vm998 = vcmp.eq.f32.partialorder %v997, 8.507059e+37
    %v999 = vand.u32 %v776, 2147483648
    %v1000 = vor.u32 1.1754944e-38, %v999
    %v1001 = vsel %vm998, %v1000, %v996
    %v1002 = vmul.f32 1.0, %v1001
    %v1003 = vrcp.pop %v777
    %v1004 = vmul.f32 %v777, %v1003
    %v1005 = vsub.f32 1.0, %v1004
    %v1006 = vmul.f32 %v1003, %v1005
    %v1007 = vadd.f32 %v1003, %v1006
    %vm1008 = vweird.f32 %v777
    %vm1009 = vweird.f32 %v1003
    %vm1010 = vmor %vm1008, %vm1009
    %v1011 = vsel %vm1010, %v1003, %v1007
    %v1012 = vand.u32 2147483647, %v777
    %vm1013 = vcmp.eq.f32.partialorder %v1012, 8.507059e+37
    %v1014 = vand.u32 %v777, 2147483648
    %v1015 = vor.u32 1.1754944e-38, %v1014
    %v1016 = vsel %vm1013, %v1015, %v1011
    %v1017 = vmul.f32 1.0, %v1016
    %1018 = vrot.lane.b32.xlu0 %v126, 32
    %v1019 = vpop.permute.xlu0 %1018
    %1020 = vrot.lane.b32.xlu0 %v127, 32
    %v1021 = vpop.permute.xlu0 %1020
    %1022 = vrot.lane.b32.xlu0 %v128, 32
    %v1023 = vpop.permute.xlu0 %1022
    %1024 = vrot.lane.b32.xlu0 %v129, 32
    %v1025 = vpop.permute.xlu0 %1024
    %1026 = vrot.lane.b32.xlu0 %v130, 32
    %v1027 = vpop.permute.xlu0 %1026
    %1028 = vrot.lane.b32.xlu0 %v131, 32
    %v1029 = vpop.permute.xlu0 %1028
    %1030 = vrot.lane.b32.xlu0 %v132, 32
    %v1031 = vpop.permute.xlu0 %1030
    %1032 = vrot.lane.b32.xlu0 %v133, 32
    %v1033 = vpop.permute.xlu0 %1032
    %1034 = vrot.lane.b32.xlu0 %v134, 32
    %v1035 = vpop.permute.xlu0 %1034
    %1036 = vrot.lane.b32.xlu0 %v135, 32
    %v1037 = vpop.permute.xlu0 %1036
    %1038 = vrot.lane.b32.xlu0 %v136, 32
    %v1039 = vpop.permute.xlu0 %1038
    %1040 = vrot.lane.b32.xlu0 %v137, 32
    %v1041 = vpop.permute.xlu0 %1040
    %1042 = vrot.lane.b32.xlu0 %v138, 32
    %v1043 = vpop.permute.xlu0 %1042
    %1044 = vrot.lane.b32.xlu0 %v139, 32
    %v1045 = vpop.permute.xlu0 %1044
    %1046 = vrot.lane.b32.xlu0 %v140, 32
    %v1047 = vpop.permute.xlu0 %1046
    %1048 = vrot.lane.b32.xlu0 %v141, 32
    %v1049 = vpop.permute.xlu0 %1048
    %v1066 = vmul.f32 %v792, %v1019
    %v1067 = vmul.f32 %v807, %v1021
    %v1068 = vmul.f32 %v822, %v1023
    %v1069 = vmul.f32 %v837, %v1025
    %v1070 = vmul.f32 %v852, %v1027
    %v1071 = vmul.f32 %v867, %v1029
    %v1072 = vmul.f32 %v882, %v1031
    %v1073 = vmul.f32 %v897, %v1033
    %v1074 = vmul.f32 %v912, %v1035
    %v1075 = vmul.f32 %v927, %v1037
    %v1076 = vmul.f32 %v942, %v1039
    %v1077 = vmul.f32 %v957, %v1041
    %v1078 = vmul.f32 %v972, %v1043
    %v1079 = vmul.f32 %v987, %v1045
    %v1080 = vmul.f32 %v1002, %v1047
    %v1081 = vmul.f32 %v1017, %v1049
    %1098 = vrot.lane.b32.xlu0 %v1066, 96
    %v1099 = vpop.permute.xlu0 %1098
    %1100 = vrot.lane.b32.xlu0 %v1067, 96
    %v1101 = vpop.permute.xlu0 %1100
    %1102 = vrot.lane.b32.xlu0 %v1068, 96
    %v1103 = vpop.permute.xlu0 %1102
    %1104 = vrot.lane.b32.xlu0 %v1069, 96
    %v1105 = vpop.permute.xlu0 %1104
    %1106 = vrot.lane.b32.xlu0 %v1070, 96
    %v1107 = vpop.permute.xlu0 %1106
    %1108 = vrot.lane.b32.xlu0 %v1071, 96
    %v1109 = vpop.permute.xlu0 %1108
    %1110 = vrot.lane.b32.xlu0 %v1072, 96
    %v1111 = vpop.permute.xlu0 %1110
    %1112 = vrot.lane.b32.xlu0 %v1073, 96
    %v1113 = vpop.permute.xlu0 %1112
    %1114 = vrot.lane.b32.xlu0 %v1074, 96
    %v1115 = vpop.permute.xlu0 %1114
    %1116 = vrot.lane.b32.xlu0 %v1075, 96
    %v1117 = vpop.permute.xlu0 %1116
    %1118 = vrot.lane.b32.xlu0 %v1076, 96
    %v1119 = vpop.permute.xlu0 %1118
    %1120 = vrot.lane.b32.xlu0 %v1077, 96
    %v1121 = vpop.permute.xlu0 %1120
    %1122 = vrot.lane.b32.xlu0 %v1078, 96
    %v1123 = vpop.permute.xlu0 %1122
    %1124 = vrot.lane.b32.xlu0 %v1079, 96
    %v1125 = vpop.permute.xlu0 %1124
    %1126 = vrot.lane.b32.xlu0 %v1080, 96
    %v1127 = vpop.permute.xlu0 %1126
    %1128 = vrot.lane.b32.xlu0 %v1081, 96
    %v1129 = vpop.permute.xlu0 %1128
    %v1130 = vsel %vm145, %v1099, 0
    %v1132 = vsel %vm145, %v1101, 0
    %v1134 = vsel %vm145, %v1103, 0
    %v1136 = vsel %vm145, %v1105, 0
    %v1138 = vsel %vm145, %v1107, 0
    %v1140 = vsel %vm145, %v1109, 0
    %v1142 = vsel %vm145, %v1111, 0
    %v1144 = vsel %vm145, %v1113, 0
    %v1146 = vsel %vm145, %v1115, 0
    %v1148 = vsel %vm145, %v1117, 0
    %v1150 = vsel %vm145, %v1119, 0
    %v1152 = vsel %vm145, %v1121, 0
    %v1154 = vsel %vm145, %v1123, 0
    %v1156 = vsel %vm145, %v1125, 0
    %v1158 = vsel %vm145, %v1127, 0
    %v1160 = vsel %vm145, %v1129, 0
    %1162 = vmatpush.msra.mxu0 0.0
    %1163 = vmatpush.msra.mxu0 0.0
    %1164 = vmatpush.msra.mxu0 0.0
    %1165 = vmatpush.msra.mxu0 0.0
    %1166 = vmatpush.msra.mxu0 0.0
    %1167 = vmatpush.msra.mxu0 0.0
    %1168 = vmatpush.msra.mxu0 0.0
    %1169 = vmatpush.msra.mxu0 0.0
    %1170 = vmatpush.msra.mxu0 0.0
    %1171 = vmatpush.msra.mxu0 0.0
    %1172 = vmatpush.msra.mxu0 0.0
    %1173 = vmatpush.msra.mxu0 0.0
    %1174 = vmatpush.msra.mxu0 %v123
    %1175 = vmatpush.msra.mxu0 %v122
    %1176 = vmatpush.msra.mxu0 %v121
    %1177 = vmatpush.msra.mxu0 %v120
    %1178 = vmatmul.f32.gmra.mxu0 %v1130
    %v1179 = vpop.f32.mrf.mxu0
    %v1180 = vadd.f32 0.0, %v1179
    %1181 = vmatmul.f32.gmra.mxu0 %v1132
    %v1182 = vpop.f32.mrf.mxu0
    %v1183 = vadd.f32 0.0, %v1182
    %1184 = vmatmul.f32.gmra.mxu0 %v1134
    %v1185 = vpop.f32.mrf.mxu0
    %v1186 = vadd.f32 0.0, %v1185
    %1187 = vmatmul.f32.gmra.mxu0 %v1136
    %v1188 = vpop.f32.mrf.mxu0
    %v1189 = vadd.f32 0.0, %v1188
    %1190 = vmatmul.f32.gmra.mxu0 %v1138
    %v1191 = vpop.f32.mrf.mxu0
    %v1192 = vadd.f32 0.0, %v1191
    %1193 = vmatmul.f32.gmra.mxu0 %v1140
    %v1194 = vpop.f32.mrf.mxu0
    %v1195 = vadd.f32 0.0, %v1194
    %1196 = vmatmul.f32.gmra.mxu0 %v1142
    %v1197 = vpop.f32.mrf.mxu0
    %v1198 = vadd.f32 0.0, %v1197
    %1199 = vmatmul.f32.gmra.mxu0 %v1144
    %v1200 = vpop.f32.mrf.mxu0
    %v1201 = vadd.f32 0.0, %v1200
    %1202 = vmatmul.f32.gmra.mxu0 %v1146
    %v1203 = vpop.f32.mrf.mxu0
    %v1204 = vadd.f32 0.0, %v1203
    %1205 = vmatmul.f32.gmra.mxu0 %v1148
    %v1206 = vpop.f32.mrf.mxu0
    %v1207 = vadd.f32 0.0, %v1206
    %1208 = vmatmul.f32.gmra.mxu0 %v1150
    %v1209 = vpop.f32.mrf.mxu0
    %v1210 = vadd.f32 0.0, %v1209
    %1211 = vmatmul.f32.gmra.mxu0 %v1152
    %v1212 = vpop.f32.mrf.mxu0
    %v1213 = vadd.f32 0.0, %v1212
    %1214 = vmatmul.f32.gmra.mxu0 %v1154
    %v1215 = vpop.f32.mrf.mxu0
    %v1216 = vadd.f32 0.0, %v1215
    %1217 = vmatmul.f32.gmra.mxu0 %v1156
    %v1218 = vpop.f32.mrf.mxu0
    %v1219 = vadd.f32 0.0, %v1218
    %1220 = vmatmul.f32.gmra.mxu0 %v1158
    %v1221 = vpop.f32.mrf.mxu0
    %v1222 = vadd.f32 0.0, %v1221
    %1223 = vmatmul.f32.gmra.mxu0 %v1160
    %v1224 = vpop.f32.mrf.mxu0
    %v1225 = vadd.f32 0.0, %v1224
    %1226 = vdwg.mxu0
    %1243 = vrot.lane.b32.xlu0 %v1180, 64
    %v1244 = vpop.permute.xlu0 %1243
    %1245 = vrot.lane.b32.xlu0 %v1183, 64
    %v1246 = vpop.permute.xlu0 %1245
    %1247 = vrot.lane.b32.xlu0 %v1186, 64
    %v1248 = vpop.permute.xlu0 %1247
    %1249 = vrot.lane.b32.xlu0 %v1189, 64
    %v1250 = vpop.permute.xlu0 %1249
    %1251 = vrot.lane.b32.xlu0 %v1192, 64
    %v1252 = vpop.permute.xlu0 %1251
    %1253 = vrot.lane.b32.xlu0 %v1195, 64
    %v1254 = vpop.permute.xlu0 %1253
    %1255 = vrot.lane.b32.xlu0 %v1198, 64
    %v1256 = vpop.permute.xlu0 %1255
    %1257 = vrot.lane.b32.xlu0 %v1201, 64
    %v1258 = vpop.permute.xlu0 %1257
    %1259 = vrot.lane.b32.xlu0 %v1204, 64
    %v1260 = vpop.permute.xlu0 %1259
    %1261 = vrot.lane.b32.xlu0 %v1207, 64
    %v1262 = vpop.permute.xlu0 %1261
    %1263 = vrot.lane.b32.xlu0 %v1210, 64
    %v1264 = vpop.permute.xlu0 %1263
    %1265 = vrot.lane.b32.xlu0 %v1213, 64
    %v1266 = vpop.permute.xlu0 %1265
    %1267 = vrot.lane.b32.xlu0 %v1216, 64
    %v1268 = vpop.permute.xlu0 %1267
    %1269 = vrot.lane.b32.xlu0 %v1219, 64
    %v1270 = vpop.permute.xlu0 %1269
    %1271 = vrot.lane.b32.xlu0 %v1222, 64
    %v1272 = vpop.permute.xlu0 %1271
    %1273 = vrot.lane.b32.xlu0 %v1225, 64
    %v1274 = vpop.permute.xlu0 %1273
    %v1291 = vadd.f32 %v603, %v1244
    %v1292 = vadd.f32 %v606, %v1246
    %v1293 = vadd.f32 %v609, %v1248
    %v1294 = vadd.f32 %v612, %v1250
    %v1295 = vadd.f32 %v615, %v1252
    %v1296 = vadd.f32 %v618, %v1254
    %v1297 = vadd.f32 %v621, %v1256
    %v1298 = vadd.f32 %v624, %v1258
    %v1299 = vadd.f32 %v627, %v1260
    %v1300 = vadd.f32 %v630, %v1262
    %v1301 = vadd.f32 %v633, %v1264
    %v1302 = vadd.f32 %v636, %v1266
    %v1303 = vadd.f32 %v639, %v1268
    %v1304 = vadd.f32 %v642, %v1270
    %v1305 = vadd.f32 %v645, %v1272
    %v1306 = vadd.f32 %v648, %v1274
    %v1307 = vtanh.pop %v1291
    %v1308 = vtanh.pop %v1292
    %v1309 = vtanh.pop %v1293
    %v1310 = vtanh.pop %v1294
    %v1311 = vtanh.pop %v1295
    %v1312 = vtanh.pop %v1296
    %v1313 = vtanh.pop %v1297
    %v1314 = vtanh.pop %v1298
    %v1315 = vtanh.pop %v1299
    %v1316 = vtanh.pop %v1300
    %v1317 = vtanh.pop %v1301
    %v1318 = vtanh.pop %v1302
    %v1319 = vtanh.pop %v1303
    %v1320 = vtanh.pop %v1304
    %v1321 = vtanh.pop %v1305
    %v1322 = vtanh.pop %v1306
    %1323 = vrot.lane.b32.xlu0 %v126, 64
    %v1324 = vpop.permute.xlu0 %1323
    %1325 = vrot.lane.b32.xlu0 %v127, 64
    %v1326 = vpop.permute.xlu0 %1325
    %1327 = vrot.lane.b32.xlu0 %v128, 64
    %v1328 = vpop.permute.xlu0 %1327
    %1329 = vrot.lane.b32.xlu0 %v129, 64
    %v1330 = vpop.permute.xlu0 %1329
    %1331 = vrot.lane.b32.xlu0 %v130, 64
    %v1332 = vpop.permute.xlu0 %1331
    %1333 = vrot.lane.b32.xlu0 %v131, 64
    %v1334 = vpop.permute.xlu0 %1333
    %1335 = vrot.lane.b32.xlu0 %v132, 64
    %v1336 = vpop.permute.xlu0 %1335
    %1337 = vrot.lane.b32.xlu0 %v133, 64
    %v1338 = vpop.permute.xlu0 %1337
    %1339 = vrot.lane.b32.xlu0 %v134, 64
    %v1340 = vpop.permute.xlu0 %1339
    %1341 = vrot.lane.b32.xlu0 %v135, 64
    %v1342 = vpop.permute.xlu0 %1341
    %1343 = vrot.lane.b32.xlu0 %v136, 64
    %v1344 = vpop.permute.xlu0 %1343
    %1345 = vrot.lane.b32.xlu0 %v137, 64
    %v1346 = vpop.permute.xlu0 %1345
    %1347 = vrot.lane.b32.xlu0 %v138, 64
    %v1348 = vpop.permute.xlu0 %1347
    %1349 = vrot.lane.b32.xlu0 %v139, 64
    %v1350 = vpop.permute.xlu0 %1349
    %1351 = vrot.lane.b32.xlu0 %v140, 64
    %v1352 = vpop.permute.xlu0 %1351
    %1353 = vrot.lane.b32.xlu0 %v141, 64
    %v1354 = vpop.permute.xlu0 %1353
    %v1371 = vsub.f32 %v1307, %v1324
    %v1372 = vsub.f32 %v1308, %v1326
    %v1373 = vsub.f32 %v1309, %v1328
    %v1374 = vsub.f32 %v1310, %v1330
    %v1375 = vsub.f32 %v1311, %v1332
    %v1376 = vsub.f32 %v1312, %v1334
    %v1377 = vsub.f32 %v1313, %v1336
    %v1378 = vsub.f32 %v1314, %v1338
    %v1379 = vsub.f32 %v1315, %v1340
    %v1380 = vsub.f32 %v1316, %v1342
    %v1381 = vsub.f32 %v1317, %v1344
    %v1382 = vsub.f32 %v1318, %v1346
    %v1383 = vsub.f32 %v1319, %v1348
    %v1384 = vsub.f32 %v1320, %v1350
    %v1385 = vsub.f32 %v1321, %v1352
    %v1386 = vsub.f32 %v1322, %v1354
    %1403 = vrot.lane.b32.xlu0 %v1371, 64
    %v1404 = vpop.permute.xlu0 %1403
    %1405 = vrot.lane.b32.xlu0 %v1372, 64
    %v1406 = vpop.permute.xlu0 %1405
    %1407 = vrot.lane.b32.xlu0 %v1373, 64
    %v1408 = vpop.permute.xlu0 %1407
    %1409 = vrot.lane.b32.xlu0 %v1374, 64
    %v1410 = vpop.permute.xlu0 %1409
    %1411 = vrot.lane.b32.xlu0 %v1375, 64
    %v1412 = vpop.permute.xlu0 %1411
    %1413 = vrot.lane.b32.xlu0 %v1376, 64
    %v1414 = vpop.permute.xlu0 %1413
    %1415 = vrot.lane.b32.xlu0 %v1377, 64
    %v1416 = vpop.permute.xlu0 %1415
    %1417 = vrot.lane.b32.xlu0 %v1378, 64
    %v1418 = vpop.permute.xlu0 %1417
    %1419 = vrot.lane.b32.xlu0 %v1379, 64
    %v1420 = vpop.permute.xlu0 %1419
    %1421 = vrot.lane.b32.xlu0 %v1380, 64
    %v1422 = vpop.permute.xlu0 %1421
    %1423 = vrot.lane.b32.xlu0 %v1381, 64
    %v1424 = vpop.permute.xlu0 %1423
    %1425 = vrot.lane.b32.xlu0 %v1382, 64
    %v1426 = vpop.permute.xlu0 %1425
    %1427 = vrot.lane.b32.xlu0 %v1383, 64
    %v1428 = vpop.permute.xlu0 %1427
    %1429 = vrot.lane.b32.xlu0 %v1384, 64
    %v1430 = vpop.permute.xlu0 %1429
    %1431 = vrot.lane.b32.xlu0 %v1385, 64
    %v1432 = vpop.permute.xlu0 %1431
    %1433 = vrot.lane.b32.xlu0 %v1386, 64
    %v1434 = vpop.permute.xlu0 %1433
    %v1451 = vmul.f32 %v792, %v1404
    %v1452 = vmul.f32 %v807, %v1406
    %v1453 = vmul.f32 %v822, %v1408
    %v1454 = vmul.f32 %v837, %v1410
    %v1455 = vmul.f32 %v852, %v1412
    %v1456 = vmul.f32 %v867, %v1414
    %v1457 = vmul.f32 %v882, %v1416
    %v1458 = vmul.f32 %v897, %v1418
    %v1459 = vmul.f32 %v912, %v1420
    %v1460 = vmul.f32 %v927, %v1422
    %v1461 = vmul.f32 %v942, %v1424
    %v1462 = vmul.f32 %v957, %v1426
    %v1463 = vmul.f32 %v972, %v1428
    %v1464 = vmul.f32 %v987, %v1430
    %v1465 = vmul.f32 %v1002, %v1432
    %v1466 = vmul.f32 %v1017, %v1434
    %v1467 = vadd.f32 %v126, %v1451
    %v1468 = vadd.f32 %v127, %v1452
    %v1469 = vadd.f32 %v128, %v1453
    %v1470 = vadd.f32 %v129, %v1454
    %v1471 = vadd.f32 %v130, %v1455
    %v1472 = vadd.f32 %v131, %v1456
    %v1473 = vadd.f32 %v132, %v1457
    %v1474 = vadd.f32 %v133, %v1458
    %v1475 = vadd.f32 %v134, %v1459
    %v1476 = vadd.f32 %v135, %v1460
    %v1477 = vadd.f32 %v136, %v1461
    %v1478 = vadd.f32 %v137, %v1462
    %v1479 = vadd.f32 %v138, %v1463
    %v1480 = vadd.f32 %v139, %v1464
    %v1481 = vadd.f32 %v140, %v1465
    %v1482 = vadd.f32 %v141, %v1466
    %v1484 = vsel %vm145, %v1467, 0
    %v1487 = vsel %vm145, %v1468, 0
    %v1490 = vsel %vm145, %v1469, 0
    %v1493 = vsel %vm145, %v1470, 0
    %v1496 = vsel %vm145, %v1471, 0
    %v1499 = vsel %vm145, %v1472, 0
    %v1502 = vsel %vm145, %v1473, 0
    %v1505 = vsel %vm145, %v1474, 0
    %v1508 = vsel %vm145, %v1475, 0
    %v1511 = vsel %vm145, %v1476, 0
    %v1514 = vsel %vm145, %v1477, 0
    %v1517 = vsel %vm145, %v1478, 0
    %v1520 = vsel %vm145, %v1479, 0
    %v1523 = vsel %vm145, %v1480, 0
    %v1526 = vsel %vm145, %v1481, 0
    %v1529 = vsel %vm145, %v1482, 0
    %1531 = vmatpush.msra.mxu0 0.0
    %1532 = vmatpush.msra.mxu0 0.0
    %1533 = vmatpush.msra.mxu0 0.0
    %1534 = vmatpush.msra.mxu0 0.0
    %1535 = vmatpush.msra.mxu0 0.0
    %1536 = vmatpush.msra.mxu0 0.0
    %1537 = vmatpush.msra.mxu0 0.0
    %1538 = vmatpush.msra.mxu0 0.0
    %1539 = vmatpush.msra.mxu0 0.0
    %1540 = vmatpush.msra.mxu0 0.0
    %1541 = vmatpush.msra.mxu0 0.0
    %1542 = vmatpush.msra.mxu0 0.0
    %1543 = vmatpush.msra.mxu0 %v111
    %1544 = vmatpush.msra.mxu0 %v110
    %1545 = vmatpush.msra.mxu0 %v109
    %1546 = vmatpush.msra.mxu0 %v108
    %1547 = vmatmul.f32.gmra.mxu0 %v1484
    %v1548 = vpop.f32.mrf.mxu0
    %v1549 = vadd.f32 %v143, %v1548
    %1550 = vmatmul.f32.gmra.mxu0 %v1487
    %v1551 = vpop.f32.mrf.mxu0
    %v1552 = vadd.f32 %v143, %v1551
    %1553 = vmatmul.f32.gmra.mxu0 %v1490
    %v1554 = vpop.f32.mrf.mxu0
    %v1555 = vadd.f32 %v143, %v1554
    %1556 = vmatmul.f32.gmra.mxu0 %v1493
    %v1557 = vpop.f32.mrf.mxu0
    %v1558 = vadd.f32 %v143, %v1557
    %1559 = vmatmul.f32.gmra.mxu0 %v1496
    %v1560 = vpop.f32.mrf.mxu0
    %v1561 = vadd.f32 %v143, %v1560
    %1562 = vmatmul.f32.gmra.mxu0 %v1499
    %v1563 = vpop.f32.mrf.mxu0
    %v1564 = vadd.f32 %v143, %v1563
    %1565 = vmatmul.f32.gmra.mxu0 %v1502
    %v1566 = vpop.f32.mrf.mxu0
    %v1567 = vadd.f32 %v143, %v1566
    %1568 = vmatmul.f32.gmra.mxu0 %v1505
    %v1569 = vpop.f32.mrf.mxu0
    %v1570 = vadd.f32 %v143, %v1569
    %1571 = vmatmul.f32.gmra.mxu0 %v1508
    %v1572 = vpop.f32.mrf.mxu0
    %v1573 = vadd.f32 %v143, %v1572
    %1574 = vmatmul.f32.gmra.mxu0 %v1511
    %v1575 = vpop.f32.mrf.mxu0
    %v1576 = vadd.f32 %v143, %v1575
    %1577 = vmatmul.f32.gmra.mxu0 %v1514
    %v1578 = vpop.f32.mrf.mxu0
    %v1579 = vadd.f32 %v143, %v1578
    %1580 = vmatmul.f32.gmra.mxu0 %v1517
    %v1581 = vpop.f32.mrf.mxu0
    %v1582 = vadd.f32 %v143, %v1581
    %1583 = vmatmul.f32.gmra.mxu0 %v1520
    %v1584 = vpop.f32.mrf.mxu0
    %v1585 = vadd.f32 %v143, %v1584
    %1586 = vmatmul.f32.gmra.mxu0 %v1523
    %v1587 = vpop.f32.mrf.mxu0
    %v1588 = vadd.f32 %v143, %v1587
    %1589 = vmatmul.f32.gmra.mxu0 %v1526
    %v1590 = vpop.f32.mrf.mxu0
    %v1591 = vadd.f32 %v143, %v1590
    %1592 = vmatmul.f32.gmra.mxu0 %v1529
    %v1593 = vpop.f32.mrf.mxu0
    %v1594 = vadd.f32 %v143, %v1593
    %1595 = vdwg.mxu0
    %1596 = vmatpush.msra.mxu0 %v1594
    %1597 = vmatpush.msra.mxu0 %v1591
    %1598 = vmatpush.msra.mxu0 %v1588
    %1599 = vmatpush.msra.mxu0 %v1585
    %1600 = vmatpush.msra.mxu0 %v1582
    %1601 = vmatpush.msra.mxu0 %v1579
    %1602 = vmatpush.msra.mxu0 %v1576
    %1603 = vmatpush.msra.mxu0 %v1573
    %1604 = vmatpush.msra.mxu0 %v1570
    %1605 = vmatpush.msra.mxu0 %v1567
    %1606 = vmatpush.msra.mxu0 %v1564
    %1607 = vmatpush.msra.mxu0 %v1561
    %1608 = vmatpush.msra.mxu0 %v1558
    %1609 = vmatpush.msra.mxu0 %v1555
    %1610 = vmatpush.msra.mxu0 %v1552
    %1611 = vmatpush.msra.mxu0 %v1549
    %1612 = vmatmul.f32.gmra.mxu0 %v76
    %v1613 = vpop.f32.mrf.mxu0
    %v1614 = vadd.f32 0.0, %v1613
    %1615 = vmatmul.f32.gmra.mxu0 %v77
    %v1616 = vpop.f32.mrf.mxu0
    %v1617 = vadd.f32 0.0, %v1616
    %1618 = vmatmul.f32.gmra.mxu0 %v78
    %v1619 = vpop.f32.mrf.mxu0
    %v1620 = vadd.f32 0.0, %v1619
    %1621 = vmatmul.f32.gmra.mxu0 %v79
    %v1622 = vpop.f32.mrf.mxu0
    %v1623 = vadd.f32 0.0, %v1622
    %1624 = vmatmul.f32.gmra.mxu0 %v80
    %v1625 = vpop.f32.mrf.mxu0
    %v1626 = vadd.f32 0.0, %v1625
    %1627 = vmatmul.f32.gmra.mxu0 %v81
    %v1628 = vpop.f32.mrf.mxu0
    %v1629 = vadd.f32 0.0, %v1628
    %1630 = vmatmul.f32.gmra.mxu0 %v82
    %v1631 = vpop.f32.mrf.mxu0
    %v1632 = vadd.f32 0.0, %v1631
    %1633 = vmatmul.f32.gmra.mxu0 %v83
    %v1634 = vpop.f32.mrf.mxu0
    %v1635 = vadd.f32 0.0, %v1634
    %1636 = vmatmul.f32.gmra.mxu0 %v84
    %v1637 = vpop.f32.mrf.mxu0
    %v1638 = vadd.f32 0.0, %v1637
    %1639 = vmatmul.f32.gmra.mxu0 %v85
    %v1640 = vpop.f32.mrf.mxu0
    %v1641 = vadd.f32 0.0, %v1640
    %1642 = vmatmul.f32.gmra.mxu0 %v86
    %v1643 = vpop.f32.mrf.mxu0
    %v1644 = vadd.f32 0.0, %v1643
    %1645 = vmatmul.f32.gmra.mxu0 %v87
    %v1646 = vpop.f32.mrf.mxu0
    %v1647 = vadd.f32 0.0, %v1646
    %1648 = vmatmul.f32.gmra.mxu0 %v88
    %v1649 = vpop.f32.mrf.mxu0
    %v1650 = vadd.f32 0.0, %v1649
    %1651 = vmatmul.f32.gmra.mxu0 %v89
    %v1652 = vpop.f32.mrf.mxu0
    %v1653 = vadd.f32 0.0, %v1652
    %1654 = vmatmul.f32.gmra.mxu0 %v90
    %v1655 = vpop.f32.mrf.mxu0
    %v1656 = vadd.f32 0.0, %v1655
    %1657 = vmatmul.f32.gmra.mxu0 %v91
    %v1658 = vpop.f32.mrf.mxu0
    %v1659 = vadd.f32 0.0, %v1658
    %1660 = vdwg.mxu0
    %1677 = vrot.lane.b32.xlu0 %v1549, 96
    %v1678 = vpop.permute.xlu0 %1677
    %1679 = vrot.lane.b32.xlu0 %v1552, 96
    %v1680 = vpop.permute.xlu0 %1679
    %1681 = vrot.lane.b32.xlu0 %v1555, 96
    %v1682 = vpop.permute.xlu0 %1681
    %1683 = vrot.lane.b32.xlu0 %v1558, 96
    %v1684 = vpop.permute.xlu0 %1683
    %1685 = vrot.lane.b32.xlu0 %v1561, 96
    %v1686 = vpop.permute.xlu0 %1685
    %1687 = vrot.lane.b32.xlu0 %v1564, 96
    %v1688 = vpop.permute.xlu0 %1687
    %1689 = vrot.lane.b32.xlu0 %v1567, 96
    %v1690 = vpop.permute.xlu0 %1689
    %1691 = vrot.lane.b32.xlu0 %v1570, 96
    %v1692 = vpop.permute.xlu0 %1691
    %1693 = vrot.lane.b32.xlu0 %v1573, 96
    %v1694 = vpop.permute.xlu0 %1693
    %1695 = vrot.lane.b32.xlu0 %v1576, 96
    %v1696 = vpop.permute.xlu0 %1695
    %1697 = vrot.lane.b32.xlu0 %v1579, 96
    %v1698 = vpop.permute.xlu0 %1697
    %1699 = vrot.lane.b32.xlu0 %v1582, 96
    %v1700 = vpop.permute.xlu0 %1699
    %1701 = vrot.lane.b32.xlu0 %v1585, 96
    %v1702 = vpop.permute.xlu0 %1701
    %1703 = vrot.lane.b32.xlu0 %v1588, 96
    %v1704 = vpop.permute.xlu0 %1703
    %1705 = vrot.lane.b32.xlu0 %v1591, 96
    %v1706 = vpop.permute.xlu0 %1705
    %1707 = vrot.lane.b32.xlu0 %v1594, 96
    %v1708 = vpop.permute.xlu0 %1707
    %1725 = vmatpush.msra.mxu0 %v1708
    %1726 = vmatpush.msra.mxu0 %v1706
    %1727 = vmatpush.msra.mxu0 %v1704
    %1728 = vmatpush.msra.mxu0 %v1702
    %1729 = vmatpush.msra.mxu0 %v1700
    %1730 = vmatpush.msra.mxu0 %v1698
    %1731 = vmatpush.msra.mxu0 %v1696
    %1732 = vmatpush.msra.mxu0 %v1694
    %1733 = vmatpush.msra.mxu0 %v1692
    %1734 = vmatpush.msra.mxu0 %v1690
    %1735 = vmatpush.msra.mxu0 %v1688
    %1736 = vmatpush.msra.mxu0 %v1686
    %1737 = vmatpush.msra.mxu0 %v1684
    %1738 = vmatpush.msra.mxu0 %v1682
    %1739 = vmatpush.msra.mxu0 %v1680
    %1740 = vmatpush.msra.mxu0 %v1678
    %1741 = vmatmul.f32.gmra.mxu0 %v92
    %v1742 = vpop.f32.mrf.mxu0
    %v1743 = vadd.f32 0.0, %v1742
    %1744 = vmatmul.f32.gmra.mxu0 %v93
    %v1745 = vpop.f32.mrf.mxu0
    %v1746 = vadd.f32 0.0, %v1745
    %1747 = vmatmul.f32.gmra.mxu0 %v94
    %v1748 = vpop.f32.mrf.mxu0
    %v1749 = vadd.f32 0.0, %v1748
    %1750 = vmatmul.f32.gmra.mxu0 %v95
    %v1751 = vpop.f32.mrf.mxu0
    %v1752 = vadd.f32 0.0, %v1751
    %1753 = vmatmul.f32.gmra.mxu0 %v96
    %v1754 = vpop.f32.mrf.mxu0
    %v1755 = vadd.f32 0.0, %v1754
    %1756 = vmatmul.f32.gmra.mxu0 %v97
    %v1757 = vpop.f32.mrf.mxu0
    %v1758 = vadd.f32 0.0, %v1757
    %1759 = vmatmul.f32.gmra.mxu0 %v98
    %v1760 = vpop.f32.mrf.mxu0
    %v1761 = vadd.f32 0.0, %v1760
    %1762 = vmatmul.f32.gmra.mxu0 %v99
    %v1763 = vpop.f32.mrf.mxu0
    %v1764 = vadd.f32 0.0, %v1763
    %1765 = vmatmul.f32.gmra.mxu0 %v100
    %v1766 = vpop.f32.mrf.mxu0
    %v1767 = vadd.f32 0.0, %v1766
    %1768 = vmatmul.f32.gmra.mxu0 %v101
    %v1769 = vpop.f32.mrf.mxu0
    %v1770 = vadd.f32 0.0, %v1769
    %1771 = vmatmul.f32.gmra.mxu0 %v102
    %v1772 = vpop.f32.mrf.mxu0
    %v1773 = vadd.f32 0.0, %v1772
    %1774 = vmatmul.f32.gmra.mxu0 %v103
    %v1775 = vpop.f32.mrf.mxu0
    %v1776 = vadd.f32 0.0, %v1775
    %1777 = vmatmul.f32.gmra.mxu0 %v104
    %v1778 = vpop.f32.mrf.mxu0
    %v1779 = vadd.f32 0.0, %v1778
    %1780 = vmatmul.f32.gmra.mxu0 %v105
    %v1781 = vpop.f32.mrf.mxu0
    %v1782 = vadd.f32 0.0, %v1781
    %1783 = vmatmul.f32.gmra.mxu0 %v106
    %v1784 = vpop.f32.mrf.mxu0
    %v1785 = vadd.f32 0.0, %v1784
    %1786 = vmatmul.f32.gmra.mxu0 %v107
    %v1787 = vpop.f32.mrf.mxu0
    %v1788 = vadd.f32 0.0, %v1787
    %1789 = vdwg.mxu0
    %1806 = vrot.lane.b32.xlu0 %v1743, 32
    %v1807 = vpop.permute.xlu0 %1806
    %1808 = vrot.lane.b32.xlu0 %v1746, 32
    %v1809 = vpop.permute.xlu0 %1808
    %1810 = vrot.lane.b32.xlu0 %v1749, 32
    %v1811 = vpop.permute.xlu0 %1810
    %1812 = vrot.lane.b32.xlu0 %v1752, 32
    %v1813 = vpop.permute.xlu0 %1812
    %1814 = vrot.lane.b32.xlu0 %v1755, 32
    %v1815 = vpop.permute.xlu0 %1814
    %1816 = vrot.lane.b32.xlu0 %v1758, 32
    %v1817 = vpop.permute.xlu0 %1816
    %1818 = vrot.lane.b32.xlu0 %v1761, 32
    %v1819 = vpop.permute.xlu0 %1818
    %1820 = vrot.lane.b32.xlu0 %v1764, 32
    %v1821 = vpop.permute.xlu0 %1820
    %1822 = vrot.lane.b32.xlu0 %v1767, 32
    %v1823 = vpop.permute.xlu0 %1822
    %1824 = vrot.lane.b32.xlu0 %v1770, 32
    %v1825 = vpop.permute.xlu0 %1824
    %1826 = vrot.lane.b32.xlu0 %v1773, 32
    %v1827 = vpop.permute.xlu0 %1826
    %1828 = vrot.lane.b32.xlu0 %v1776, 32
    %v1829 = vpop.permute.xlu0 %1828
    %1830 = vrot.lane.b32.xlu0 %v1779, 32
    %v1831 = vpop.permute.xlu0 %1830
    %1832 = vrot.lane.b32.xlu0 %v1782, 32
    %v1833 = vpop.permute.xlu0 %1832
    %1834 = vrot.lane.b32.xlu0 %v1785, 32
    %v1835 = vpop.permute.xlu0 %1834
    %1836 = vrot.lane.b32.xlu0 %v1788, 32
    %v1837 = vpop.permute.xlu0 %1836
    %v1854 = vsel %vm145, %v1614, %v1807
    %v1855 = vsel %vm145, %v1617, %v1809
    %v1856 = vsel %vm145, %v1620, %v1811
    %v1857 = vsel %vm145, %v1623, %v1813
    %v1858 = vsel %vm145, %v1626, %v1815
    %v1859 = vsel %vm145, %v1629, %v1817
    %v1860 = vsel %vm145, %v1632, %v1819
    %v1861 = vsel %vm145, %v1635, %v1821
    %v1862 = vsel %vm145, %v1638, %v1823
    %v1863 = vsel %vm145, %v1641, %v1825
    %v1864 = vsel %vm145, %v1644, %v1827
    %v1865 = vsel %vm145, %v1647, %v1829
    %v1866 = vsel %vm145, %v1650, %v1831
    %v1867 = vsel %vm145, %v1653, %v1833
    %v1868 = vsel %vm145, %v1656, %v1835
    %v1869 = vsel %vm145, %v1659, %v1837
    %v1871 = vsel %vm536, %v1854, 0
    %v1874 = vsel %vm536, %v1855, 0
    %v1877 = vsel %vm536, %v1856, 0
    %v1880 = vsel %vm536, %v1857, 0
    %v1883 = vsel %vm536, %v1858, 0
    %v1886 = vsel %vm536, %v1859, 0
    %v1889 = vsel %vm536, %v1860, 0
    %v1892 = vsel %vm536, %v1861, 0
    %v1895 = vsel %vm536, %v1862, 0
    %v1898 = vsel %vm536, %v1863, 0
    %v1901 = vsel %vm536, %v1864, 0
    %v1904 = vsel %vm536, %v1865, 0
    %v1907 = vsel %vm536, %v1866, 0
    %v1910 = vsel %vm536, %v1867, 0
    %v1913 = vsel %vm536, %v1868, 0
    %v1916 = vsel %vm536, %v1869, 0
    %1918 = vmatpush.msra.mxu0 0.0
    %1919 = vmatpush.msra.mxu0 0.0
    %1920 = vmatpush.msra.mxu0 0.0
    %1921 = vmatpush.msra.mxu0 0.0
    %1922 = vmatpush.msra.mxu0 0.0
    %1923 = vmatpush.msra.mxu0 0.0
    %1924 = vmatpush.msra.mxu0 0.0
    %1925 = vmatpush.msra.mxu0 0.0
    %1926 = vmatpush.msra.mxu0 %v119
    %1927 = vmatpush.msra.mxu0 %v118
    %1928 = vmatpush.msra.mxu0 %v117
    %1929 = vmatpush.msra.mxu0 %v116
    %1930 = vmatpush.msra.mxu0 %v115
    %1931 = vmatpush.msra.mxu0 %v114
    %1932 = vmatpush.msra.mxu0 %v113
    %1933 = vmatpush.msra.mxu0 %v112
    %1934 = vmatmul.f32.gmra.mxu0 %v1871
    %v1935 = vpop.f32.mrf.mxu0
    %v1936 = vadd.f32 %v534, %v1935
    %1937 = vmatmul.f32.gmra.mxu0 %v1874
    %v1938 = vpop.f32.mrf.mxu0
    %v1939 = vadd.f32 %v534, %v1938
    %1940 = vmatmul.f32.gmra.mxu0 %v1877
    %v1941 = vpop.f32.mrf.mxu0
    %v1942 = vadd.f32 %v534, %v1941
    %1943 = vmatmul.f32.gmra.mxu0 %v1880
    %v1944 = vpop.f32.mrf.mxu0
    %v1945 = vadd.f32 %v534, %v1944
    %1946 = vmatmul.f32.gmra.mxu0 %v1883
    %v1947 = vpop.f32.mrf.mxu0
    %v1948 = vadd.f32 %v534, %v1947
    %1949 = vmatmul.f32.gmra.mxu0 %v1886
    %v1950 = vpop.f32.mrf.mxu0
    %v1951 = vadd.f32 %v534, %v1950
    %1952 = vmatmul.f32.gmra.mxu0 %v1889
    %v1953 = vpop.f32.mrf.mxu0
    %v1954 = vadd.f32 %v534, %v1953
    %1955 = vmatmul.f32.gmra.mxu0 %v1892
    %v1956 = vpop.f32.mrf.mxu0
    %v1957 = vadd.f32 %v534, %v1956
    %1958 = vmatmul.f32.gmra.mxu0 %v1895
    %v1959 = vpop.f32.mrf.mxu0
    %v1960 = vadd.f32 %v534, %v1959
    %1961 = vmatmul.f32.gmra.mxu0 %v1898
    %v1962 = vpop.f32.mrf.mxu0
    %v1963 = vadd.f32 %v534, %v1962
    %1964 = vmatmul.f32.gmra.mxu0 %v1901
    %v1965 = vpop.f32.mrf.mxu0
    %v1966 = vadd.f32 %v534, %v1965
    %1967 = vmatmul.f32.gmra.mxu0 %v1904
    %v1968 = vpop.f32.mrf.mxu0
    %v1969 = vadd.f32 %v534, %v1968
    %1970 = vmatmul.f32.gmra.mxu0 %v1907
    %v1971 = vpop.f32.mrf.mxu0
    %v1972 = vadd.f32 %v534, %v1971
    %1973 = vmatmul.f32.gmra.mxu0 %v1910
    %v1974 = vpop.f32.mrf.mxu0
    %v1975 = vadd.f32 %v534, %v1974
    %1976 = vmatmul.f32.gmra.mxu0 %v1913
    %v1977 = vpop.f32.mrf.mxu0
    %v1978 = vadd.f32 %v534, %v1977
    %1979 = vmatmul.f32.gmra.mxu0 %v1916
    %v1980 = vpop.f32.mrf.mxu0
    %v1981 = vadd.f32 %v534, %v1980
    %1982 = vdwg.mxu0
    %1983 = vrot.lane.b32.xlu0 %v1549, 64
    %v1984 = vpop.permute.xlu0 %1983
    %1985 = vrot.lane.b32.xlu0 %v1552, 64
    %v1986 = vpop.permute.xlu0 %1985
    %1987 = vrot.lane.b32.xlu0 %v1555, 64
    %v1988 = vpop.permute.xlu0 %1987
    %1989 = vrot.lane.b32.xlu0 %v1558, 64
    %v1990 = vpop.permute.xlu0 %1989
    %1991 = vrot.lane.b32.xlu0 %v1561, 64
    %v1992 = vpop.permute.xlu0 %1991
    %1993 = vrot.lane.b32.xlu0 %v1564, 64
    %v1994 = vpop.permute.xlu0 %1993
    %1995 = vrot.lane.b32.xlu0 %v1567, 64
    %v1996 = vpop.permute.xlu0 %1995
    %1997 = vrot.lane.b32.xlu0 %v1570, 64
    %v1998 = vpop.permute.xlu0 %1997
    %1999 = vrot.lane.b32.xlu0 %v1573, 64
    %v2000 = vpop.permute.xlu0 %1999
    %2001 = vrot.lane.b32.xlu0 %v1576, 64
    %v2002 = vpop.permute.xlu0 %2001
    %2003 = vrot.lane.b32.xlu0 %v1579, 64
    %v2004 = vpop.permute.xlu0 %2003
    %2005 = vrot.lane.b32.xlu0 %v1582, 64
    %v2006 = vpop.permute.xlu0 %2005
    %2007 = vrot.lane.b32.xlu0 %v1585, 64
    %v2008 = vpop.permute.xlu0 %2007
    %2009 = vrot.lane.b32.xlu0 %v1588, 64
    %v2010 = vpop.permute.xlu0 %2009
    %2011 = vrot.lane.b32.xlu0 %v1591, 64
    %v2012 = vpop.permute.xlu0 %2011
    %2013 = vrot.lane.b32.xlu0 %v1594, 64
    %v2014 = vpop.permute.xlu0 %2013
    %v2031 = vadd.f32 %v1936, %v1984
    %v2032 = vadd.f32 %v1939, %v1986
    %v2033 = vadd.f32 %v1942, %v1988
    %v2034 = vadd.f32 %v1945, %v1990
    %v2035 = vadd.f32 %v1948, %v1992
    %v2036 = vadd.f32 %v1951, %v1994
    %v2037 = vadd.f32 %v1954, %v1996
    %v2038 = vadd.f32 %v1957, %v1998
    %v2039 = vadd.f32 %v1960, %v2000
    %v2040 = vadd.f32 %v1963, %v2002
    %v2041 = vadd.f32 %v1966, %v2004
    %v2042 = vadd.f32 %v1969, %v2006
    %v2043 = vadd.f32 %v1972, %v2008
    %v2044 = vadd.f32 %v1975, %v2010
    %v2045 = vadd.f32 %v1978, %v2012
    %v2046 = vadd.f32 %v1981, %v2014
    %v2047 = vxor.u32 %v2031, 2147483648
    %v2048 = vxor.u32 %v2032, 2147483648
    %v2049 = vxor.u32 %v2033, 2147483648
    %v2050 = vxor.u32 %v2034, 2147483648
    %v2051 = vxor.u32 %v2035, 2147483648
    %v2052 = vxor.u32 %v2036, 2147483648
    %v2053 = vxor.u32 %v2037, 2147483648
    %v2054 = vxor.u32 %v2038, 2147483648
    %v2055 = vxor.u32 %v2039, 2147483648
    %v2056 = vxor.u32 %v2040, 2147483648
    %v2057 = vxor.u32 %v2041, 2147483648
    %v2058 = vxor.u32 %v2042, 2147483648
    %v2059 = vxor.u32 %v2043, 2147483648
    %v2060 = vxor.u32 %v2044, 2147483648
    %v2061 = vxor.u32 %v2045, 2147483648
    %v2062 = vxor.u32 %v2046, 2147483648
    %v2063 = vmul.f32 %v2047, 1.442695
    %v2064 = vpow.pop %v2063
    %v2065 = vmul.f32 %v2048, 1.442695
    %v2066 = vpow.pop %v2065
    %v2067 = vmul.f32 %v2049, 1.442695
    %v2068 = vpow.pop %v2067
    %v2069 = vmul.f32 %v2050, 1.442695
    %v2070 = vpow.pop %v2069
    %v2071 = vmul.f32 %v2051, 1.442695
    %v2072 = vpow.pop %v2071
    %v2073 = vmul.f32 %v2052, 1.442695
    %v2074 = vpow.pop %v2073
    %v2075 = vmul.f32 %v2053, 1.442695
    %v2076 = vpow.pop %v2075
    %v2077 = vmul.f32 %v2054, 1.442695
    %v2078 = vpow.pop %v2077
    %v2079 = vmul.f32 %v2055, 1.442695
    %v2080 = vpow.pop %v2079
    %v2081 = vmul.f32 %v2056, 1.442695
    %v2082 = vpow.pop %v2081
    %v2083 = vmul.f32 %v2057, 1.442695
    %v2084 = vpow.pop %v2083
    %v2085 = vmul.f32 %v2058, 1.442695
    %v2086 = vpow.pop %v2085
    %v2087 = vmul.f32 %v2059, 1.442695
    %v2088 = vpow.pop %v2087
    %v2089 = vmul.f32 %v2060, 1.442695
    %v2090 = vpow.pop %v2089
    %v2091 = vmul.f32 %v2061, 1.442695
    %v2092 = vpow.pop %v2091
    %v2093 = vmul.f32 %v2062, 1.442695
    %v2094 = vpow.pop %v2093
    %v2095 = vadd.f32 %v2064, 1.0
    %v2096 = vadd.f32 %v2066, 1.0
    %v2097 = vadd.f32 %v2068, 1.0
    %v2098 = vadd.f32 %v2070, 1.0
    %v2099 = vadd.f32 %v2072, 1.0
    %v2100 = vadd.f32 %v2074, 1.0
    %v2101 = vadd.f32 %v2076, 1.0
    %v2102 = vadd.f32 %v2078, 1.0
    %v2103 = vadd.f32 %v2080, 1.0
    %v2104 = vadd.f32 %v2082, 1.0
    %v2105 = vadd.f32 %v2084, 1.0
    %v2106 = vadd.f32 %v2086, 1.0
    %v2107 = vadd.f32 %v2088, 1.0
    %v2108 = vadd.f32 %v2090, 1.0
    %v2109 = vadd.f32 %v2092, 1.0
    %v2110 = vadd.f32 %v2094, 1.0
    %v2111 = vrcp.pop %v2095
    %v2112 = vmul.f32 %v2095, %v2111
    %v2113 = vsub.f32 1.0, %v2112
    %v2114 = vmul.f32 %v2111, %v2113
    %v2115 = vadd.f32 %v2111, %v2114
    %vm2116 = vweird.f32 %v2095
    %vm2117 = vweird.f32 %v2111
    %vm2118 = vmor %vm2116, %vm2117
    %v2119 = vsel %vm2118, %v2111, %v2115
    %v2120 = vand.u32 2147483647, %v2095
    %vm2121 = vcmp.eq.f32.partialorder %v2120, 8.507059e+37
    %v2122 = vand.u32 %v2095, 2147483648
    %v2123 = vor.u32 1.1754944e-38, %v2122
    %v2124 = vsel %vm2121, %v2123, %v2119
    %v2125 = vmul.f32 1.0, %v2124
    %v2126 = vrcp.pop %v2096
    %v2127 = vmul.f32 %v2096, %v2126
    %v2128 = vsub.f32 1.0, %v2127
    %v2129 = vmul.f32 %v2126, %v2128
    %v2130 = vadd.f32 %v2126, %v2129
    %vm2131 = vweird.f32 %v2096
    %vm2132 = vweird.f32 %v2126
    %vm2133 = vmor %vm2131, %vm2132
    %v2134 = vsel %vm2133, %v2126, %v2130
    %v2135 = vand.u32 2147483647, %v2096
    %vm2136 = vcmp.eq.f32.partialorder %v2135, 8.507059e+37
    %v2137 = vand.u32 %v2096, 2147483648
    %v2138 = vor.u32 1.1754944e-38, %v2137
    %v2139 = vsel %vm2136, %v2138, %v2134
    %v2140 = vmul.f32 1.0, %v2139
    %v2141 = vrcp.pop %v2097
    %v2142 = vmul.f32 %v2097, %v2141
    %v2143 = vsub.f32 1.0, %v2142
    %v2144 = vmul.f32 %v2141, %v2143
    %v2145 = vadd.f32 %v2141, %v2144
    %vm2146 = vweird.f32 %v2097
    %vm2147 = vweird.f32 %v2141
    %vm2148 = vmor %vm2146, %vm2147
    %v2149 = vsel %vm2148, %v2141, %v2145
    %v2150 = vand.u32 2147483647, %v2097
    %vm2151 = vcmp.eq.f32.partialorder %v2150, 8.507059e+37
    %v2152 = vand.u32 %v2097, 2147483648
    %v2153 = vor.u32 1.1754944e-38, %v2152
    %v2154 = vsel %vm2151, %v2153, %v2149
    %v2155 = vmul.f32 1.0, %v2154
    %v2156 = vrcp.pop %v2098
    %v2157 = vmul.f32 %v2098, %v2156
    %v2158 = vsub.f32 1.0, %v2157
    %v2159 = vmul.f32 %v2156, %v2158
    %v2160 = vadd.f32 %v2156, %v2159
    %vm2161 = vweird.f32 %v2098
    %vm2162 = vweird.f32 %v2156
    %vm2163 = vmor %vm2161, %vm2162
    %v2164 = vsel %vm2163, %v2156, %v2160
    %v2165 = vand.u32 2147483647, %v2098
    %vm2166 = vcmp.eq.f32.partialorder %v2165, 8.507059e+37
    %v2167 = vand.u32 %v2098, 2147483648
    %v2168 = vor.u32 1.1754944e-38, %v2167
    %v2169 = vsel %vm2166, %v2168, %v2164
    %v2170 = vmul.f32 1.0, %v2169
    %v2171 = vrcp.pop %v2099
    %v2172 = vmul.f32 %v2099, %v2171
    %v2173 = vsub.f32 1.0, %v2172
    %v2174 = vmul.f32 %v2171, %v2173
    %v2175 = vadd.f32 %v2171, %v2174
    %vm2176 = vweird.f32 %v2099
    %vm2177 = vweird.f32 %v2171
    %vm2178 = vmor %vm2176, %vm2177
    %v2179 = vsel %vm2178, %v2171, %v2175
    %v2180 = vand.u32 2147483647, %v2099
    %vm2181 = vcmp.eq.f32.partialorder %v2180, 8.507059e+37
    %v2182 = vand.u32 %v2099, 2147483648
    %v2183 = vor.u32 1.1754944e-38, %v2182
    %v2184 = vsel %vm2181, %v2183, %v2179
    %v2185 = vmul.f32 1.0, %v2184
    %v2186 = vrcp.pop %v2100
    %v2187 = vmul.f32 %v2100, %v2186
    %v2188 = vsub.f32 1.0, %v2187
    %v2189 = vmul.f32 %v2186, %v2188
    %v2190 = vadd.f32 %v2186, %v2189
    %vm2191 = vweird.f32 %v2100
    %vm2192 = vweird.f32 %v2186
    %vm2193 = vmor %vm2191, %vm2192
    %v2194 = vsel %vm2193, %v2186, %v2190
    %v2195 = vand.u32 2147483647, %v2100
    %vm2196 = vcmp.eq.f32.partialorder %v2195, 8.507059e+37
    %v2197 = vand.u32 %v2100, 2147483648
    %v2198 = vor.u32 1.1754944e-38, %v2197
    %v2199 = vsel %vm2196, %v2198, %v2194
    %v2200 = vmul.f32 1.0, %v2199
    %v2201 = vrcp.pop %v2101
    %v2202 = vmul.f32 %v2101, %v2201
    %v2203 = vsub.f32 1.0, %v2202
    %v2204 = vmul.f32 %v2201, %v2203
    %v2205 = vadd.f32 %v2201, %v2204
    %vm2206 = vweird.f32 %v2101
    %vm2207 = vweird.f32 %v2201
    %vm2208 = vmor %vm2206, %vm2207
    %v2209 = vsel %vm2208, %v2201, %v2205
    %v2210 = vand.u32 2147483647, %v2101
    %vm2211 = vcmp.eq.f32.partialorder %v2210, 8.507059e+37
    %v2212 = vand.u32 %v2101, 2147483648
    %v2213 = vor.u32 1.1754944e-38, %v2212
    %v2214 = vsel %vm2211, %v2213, %v2209
    %v2215 = vmul.f32 1.0, %v2214
    %v2216 = vrcp.pop %v2102
    %v2217 = vmul.f32 %v2102, %v2216
    %v2218 = vsub.f32 1.0, %v2217
    %v2219 = vmul.f32 %v2216, %v2218
    %v2220 = vadd.f32 %v2216, %v2219
    %vm2221 = vweird.f32 %v2102
    %vm2222 = vweird.f32 %v2216
    %vm2223 = vmor %vm2221, %vm2222
    %v2224 = vsel %vm2223, %v2216, %v2220
    %v2225 = vand.u32 2147483647, %v2102
    %vm2226 = vcmp.eq.f32.partialorder %v2225, 8.507059e+37
    %v2227 = vand.u32 %v2102, 2147483648
    %v2228 = vor.u32 1.1754944e-38, %v2227
    %v2229 = vsel %vm2226, %v2228, %v2224
    %v2230 = vmul.f32 1.0, %v2229
    %v2231 = vrcp.pop %v2103
    %v2232 = vmul.f32 %v2103, %v2231
    %v2233 = vsub.f32 1.0, %v2232
    %v2234 = vmul.f32 %v2231, %v2233
    %v2235 = vadd.f32 %v2231, %v2234
    %vm2236 = vweird.f32 %v2103
    %vm2237 = vweird.f32 %v2231
    %vm2238 = vmor %vm2236, %vm2237
    %v2239 = vsel %vm2238, %v2231, %v2235
    %v2240 = vand.u32 2147483647, %v2103
    %vm2241 = vcmp.eq.f32.partialorder %v2240, 8.507059e+37
    %v2242 = vand.u32 %v2103, 2147483648
    %v2243 = vor.u32 1.1754944e-38, %v2242
    %v2244 = vsel %vm2241, %v2243, %v2239
    %v2245 = vmul.f32 1.0, %v2244
    %v2246 = vrcp.pop %v2104
    %v2247 = vmul.f32 %v2104, %v2246
    %v2248 = vsub.f32 1.0, %v2247
    %v2249 = vmul.f32 %v2246, %v2248
    %v2250 = vadd.f32 %v2246, %v2249
    %vm2251 = vweird.f32 %v2104
    %vm2252 = vweird.f32 %v2246
    %vm2253 = vmor %vm2251, %vm2252
    %v2254 = vsel %vm2253, %v2246, %v2250
    %v2255 = vand.u32 2147483647, %v2104
    %vm2256 = vcmp.eq.f32.partialorder %v2255, 8.507059e+37
    %v2257 = vand.u32 %v2104, 2147483648
    %v2258 = vor.u32 1.1754944e-38, %v2257
    %v2259 = vsel %vm2256, %v2258, %v2254
    %v2260 = vmul.f32 1.0, %v2259
    %v2261 = vrcp.pop %v2105
    %v2262 = vmul.f32 %v2105, %v2261
    %v2263 = vsub.f32 1.0, %v2262
    %v2264 = vmul.f32 %v2261, %v2263
    %v2265 = vadd.f32 %v2261, %v2264
    %vm2266 = vweird.f32 %v2105
    %vm2267 = vweird.f32 %v2261
    %vm2268 = vmor %vm2266, %vm2267
    %v2269 = vsel %vm2268, %v2261, %v2265
    %v2270 = vand.u32 2147483647, %v2105
    %vm2271 = vcmp.eq.f32.partialorder %v2270, 8.507059e+37
    %v2272 = vand.u32 %v2105, 2147483648
    %v2273 = vor.u32 1.1754944e-38, %v2272
    %v2274 = vsel %vm2271, %v2273, %v2269
    %v2275 = vmul.f32 1.0, %v2274
    %v2276 = vrcp.pop %v2106
    %v2277 = vmul.f32 %v2106, %v2276
    %v2278 = vsub.f32 1.0, %v2277
    %v2279 = vmul.f32 %v2276, %v2278
    %v2280 = vadd.f32 %v2276, %v2279
    %vm2281 = vweird.f32 %v2106
    %vm2282 = vweird.f32 %v2276
    %vm2283 = vmor %vm2281, %vm2282
    %v2284 = vsel %vm2283, %v2276, %v2280
    %v2285 = vand.u32 2147483647, %v2106
    %vm2286 = vcmp.eq.f32.partialorder %v2285, 8.507059e+37
    %v2287 = vand.u32 %v2106, 2147483648
    %v2288 = vor.u32 1.1754944e-38, %v2287
    %v2289 = vsel %vm2286, %v2288, %v2284
    %v2290 = vmul.f32 1.0, %v2289
    %v2291 = vrcp.pop %v2107
    %v2292 = vmul.f32 %v2107, %v2291
    %v2293 = vsub.f32 1.0, %v2292
    %v2294 = vmul.f32 %v2291, %v2293
    %v2295 = vadd.f32 %v2291, %v2294
    %vm2296 = vweird.f32 %v2107
    %vm2297 = vweird.f32 %v2291
    %vm2298 = vmor %vm2296, %vm2297
    %v2299 = vsel %vm2298, %v2291, %v2295
    %v2300 = vand.u32 2147483647, %v2107
    %vm2301 = vcmp.eq.f32.partialorder %v2300, 8.507059e+37
    %v2302 = vand.u32 %v2107, 2147483648
    %v2303 = vor.u32 1.1754944e-38, %v2302
    %v2304 = vsel %vm2301, %v2303, %v2299
    %v2305 = vmul.f32 1.0, %v2304
    %v2306 = vrcp.pop %v2108
    %v2307 = vmul.f32 %v2108, %v2306
    %v2308 = vsub.f32 1.0, %v2307
    %v2309 = vmul.f32 %v2306, %v2308
    %v2310 = vadd.f32 %v2306, %v2309
    %vm2311 = vweird.f32 %v2108
    %vm2312 = vweird.f32 %v2306
    %vm2313 = vmor %vm2311, %vm2312
    %v2314 = vsel %vm2313, %v2306, %v2310
    %v2315 = vand.u32 2147483647, %v2108
    %vm2316 = vcmp.eq.f32.partialorder %v2315, 8.507059e+37
    %v2317 = vand.u32 %v2108, 2147483648
    %v2318 = vor.u32 1.1754944e-38, %v2317
    %v2319 = vsel %vm2316, %v2318, %v2314
    %v2320 = vmul.f32 1.0, %v2319
    %v2321 = vrcp.pop %v2109
    %v2322 = vmul.f32 %v2109, %v2321
    %v2323 = vsub.f32 1.0, %v2322
    %v2324 = vmul.f32 %v2321, %v2323
    %v2325 = vadd.f32 %v2321, %v2324
    %vm2326 = vweird.f32 %v2109
    %vm2327 = vweird.f32 %v2321
    %vm2328 = vmor %vm2326, %vm2327
    %v2329 = vsel %vm2328, %v2321, %v2325
    %v2330 = vand.u32 2147483647, %v2109
    %vm2331 = vcmp.eq.f32.partialorder %v2330, 8.507059e+37
    %v2332 = vand.u32 %v2109, 2147483648
    %v2333 = vor.u32 1.1754944e-38, %v2332
    %v2334 = vsel %vm2331, %v2333, %v2329
    %v2335 = vmul.f32 1.0, %v2334
    %v2336 = vrcp.pop %v2110
    %v2337 = vmul.f32 %v2110, %v2336
    %v2338 = vsub.f32 1.0, %v2337
    %v2339 = vmul.f32 %v2336, %v2338
    %v2340 = vadd.f32 %v2336, %v2339
    %vm2341 = vweird.f32 %v2110
    %vm2342 = vweird.f32 %v2336
    %vm2343 = vmor %vm2341, %vm2342
    %v2344 = vsel %vm2343, %v2336, %v2340
    %v2345 = vand.u32 2147483647, %v2110
    %vm2346 = vcmp.eq.f32.partialorder %v2345, 8.507059e+37
    %v2347 = vand.u32 %v2110, 2147483648
    %v2348 = vor.u32 1.1754944e-38, %v2347
    %v2349 = vsel %vm2346, %v2348, %v2344
    %v2350 = vmul.f32 1.0, %v2349
    %2351 = vrot.lane.b32.xlu0 %v1467, 32
    %v2352 = vpop.permute.xlu0 %2351
    %2353 = vrot.lane.b32.xlu0 %v1468, 32
    %v2354 = vpop.permute.xlu0 %2353
    %2355 = vrot.lane.b32.xlu0 %v1469, 32
    %v2356 = vpop.permute.xlu0 %2355
    %2357 = vrot.lane.b32.xlu0 %v1470, 32
    %v2358 = vpop.permute.xlu0 %2357
    %2359 = vrot.lane.b32.xlu0 %v1471, 32
    %v2360 = vpop.permute.xlu0 %2359
    %2361 = vrot.lane.b32.xlu0 %v1472, 32
    %v2362 = vpop.permute.xlu0 %2361
    %2363 = vrot.lane.b32.xlu0 %v1473, 32
    %v2364 = vpop.permute.xlu0 %2363
    %2365 = vrot.lane.b32.xlu0 %v1474, 32
    %v2366 = vpop.permute.xlu0 %2365
    %2367 = vrot.lane.b32.xlu0 %v1475, 32
    %v2368 = vpop.permute.xlu0 %2367
    %2369 = vrot.lane.b32.xlu0 %v1476, 32
    %v2370 = vpop.permute.xlu0 %2369
    %2371 = vrot.lane.b32.xlu0 %v1477, 32
    %v2372 = vpop.permute.xlu0 %2371
    %2373 = vrot.lane.b32.xlu0 %v1478, 32
    %v2374 = vpop.permute.xlu0 %2373
    %2375 = vrot.lane.b32.xlu0 %v1479, 32
    %v2376 = vpop.permute.xlu0 %2375
    %2377 = vrot.lane.b32.xlu0 %v1480, 32
    %v2378 = vpop.permute.xlu0 %2377
    %2379 = vrot.lane.b32.xlu0 %v1481, 32
    %v2380 = vpop.permute.xlu0 %2379
    %2381 = vrot.lane.b32.xlu0 %v1482, 32
    %v2382 = vpop.permute.xlu0 %2381
    %v2399 = vmul.f32 %v2125, %v2352
    %v2400 = vmul.f32 %v2140, %v2354
    %v2401 = vmul.f32 %v2155, %v2356
    %v2402 = vmul.f32 %v2170, %v2358
    %v2403 = vmul.f32 %v2185, %v2360
    %v2404 = vmul.f32 %v2200, %v2362
    %v2405 = vmul.f32 %v2215, %v2364
    %v2406 = vmul.f32 %v2230, %v2366
    %v2407 = vmul.f32 %v2245, %v2368
    %v2408 = vmul.f32 %v2260, %v2370
    %v2409 = vmul.f32 %v2275, %v2372
    %v2410 = vmul.f32 %v2290, %v2374
    %v2411 = vmul.f32 %v2305, %v2376
    %v2412 = vmul.f32 %v2320, %v2378
    %v2413 = vmul.f32 %v2335, %v2380
    %v2414 = vmul.f32 %v2350, %v2382
    %2431 = vrot.lane.b32.xlu0 %v2399, 96
    %v2432 = vpop.permute.xlu0 %2431
    %2433 = vrot.lane.b32.xlu0 %v2400, 96
    %v2434 = vpop.permute.xlu0 %2433
    %2435 = vrot.lane.b32.xlu0 %v2401, 96
    %v2436 = vpop.permute.xlu0 %2435
    %2437 = vrot.lane.b32.xlu0 %v2402, 96
    %v2438 = vpop.permute.xlu0 %2437
    %2439 = vrot.lane.b32.xlu0 %v2403, 96
    %v2440 = vpop.permute.xlu0 %2439
    %2441 = vrot.lane.b32.xlu0 %v2404, 96
    %v2442 = vpop.permute.xlu0 %2441
    %2443 = vrot.lane.b32.xlu0 %v2405, 96
    %v2444 = vpop.permute.xlu0 %2443
    %2445 = vrot.lane.b32.xlu0 %v2406, 96
    %v2446 = vpop.permute.xlu0 %2445
    %2447 = vrot.lane.b32.xlu0 %v2407, 96
    %v2448 = vpop.permute.xlu0 %2447
    %2449 = vrot.lane.b32.xlu0 %v2408, 96
    %v2450 = vpop.permute.xlu0 %2449
    %2451 = vrot.lane.b32.xlu0 %v2409, 96
    %v2452 = vpop.permute.xlu0 %2451
    %2453 = vrot.lane.b32.xlu0 %v2410, 96
    %v2454 = vpop.permute.xlu0 %2453
    %2455 = vrot.lane.b32.xlu0 %v2411, 96
    %v2456 = vpop.permute.xlu0 %2455
    %2457 = vrot.lane.b32.xlu0 %v2412, 96
    %v2458 = vpop.permute.xlu0 %2457
    %2459 = vrot.lane.b32.xlu0 %v2413, 96
    %v2460 = vpop.permute.xlu0 %2459
    %2461 = vrot.lane.b32.xlu0 %v2414, 96
    %v2462 = vpop.permute.xlu0 %2461
    %v2463 = vsel %vm145, %v2432, 0
    %v2465 = vsel %vm145, %v2434, 0
    %v2467 = vsel %vm145, %v2436, 0
    %v2469 = vsel %vm145, %v2438, 0
    %v2471 = vsel %vm145, %v2440, 0
    %v2473 = vsel %vm145, %v2442, 0
    %v2475 = vsel %vm145, %v2444, 0
    %v2477 = vsel %vm145, %v2446, 0
    %v2479 = vsel %vm145, %v2448, 0
    %v2481 = vsel %vm145, %v2450, 0
    %v2483 = vsel %vm145, %v2452, 0
    %v2485 = vsel %vm145, %v2454, 0
    %v2487 = vsel %vm145, %v2456, 0
    %v2489 = vsel %vm145, %v2458, 0
    %v2491 = vsel %vm145, %v2460, 0
    %v2493 = vsel %vm145, %v2462, 0
    %2495 = vmatpush.msra.mxu0 0.0
    %2496 = vmatpush.msra.mxu0 0.0
    %2497 = vmatpush.msra.mxu0 0.0
    %2498 = vmatpush.msra.mxu0 0.0
    %2499 = vmatpush.msra.mxu0 0.0
    %2500 = vmatpush.msra.mxu0 0.0
    %2501 = vmatpush.msra.mxu0 0.0
    %2502 = vmatpush.msra.mxu0 0.0
    %2503 = vmatpush.msra.mxu0 0.0
    %2504 = vmatpush.msra.mxu0 0.0
    %2505 = vmatpush.msra.mxu0 0.0
    %2506 = vmatpush.msra.mxu0 0.0
    %2507 = vmatpush.msra.mxu0 %v123
    %2508 = vmatpush.msra.mxu0 %v122
    %2509 = vmatpush.msra.mxu0 %v121
    %2510 = vmatpush.msra.mxu0 %v120
    %2511 = vmatmul.f32.gmra.mxu0 %v2463
    %v2512 = vpop.f32.mrf.mxu0
    %v2513 = vadd.f32 0.0, %v2512
    %2514 = vmatmul.f32.gmra.mxu0 %v2465
    %v2515 = vpop.f32.mrf.mxu0
    %v2516 = vadd.f32 0.0, %v2515
    %2517 = vmatmul.f32.gmra.mxu0 %v2467
    %v2518 = vpop.f32.mrf.mxu0
    %v2519 = vadd.f32 0.0, %v2518
    %2520 = vmatmul.f32.gmra.mxu0 %v2469
    %v2521 = vpop.f32.mrf.mxu0
    %v2522 = vadd.f32 0.0, %v2521
    %2523 = vmatmul.f32.gmra.mxu0 %v2471
    %v2524 = vpop.f32.mrf.mxu0
    %v2525 = vadd.f32 0.0, %v2524
    %2526 = vmatmul.f32.gmra.mxu0 %v2473
    %v2527 = vpop.f32.mrf.mxu0
    %v2528 = vadd.f32 0.0, %v2527
    %2529 = vmatmul.f32.gmra.mxu0 %v2475
    %v2530 = vpop.f32.mrf.mxu0
    %v2531 = vadd.f32 0.0, %v2530
    %2532 = vmatmul.f32.gmra.mxu0 %v2477
    %v2533 = vpop.f32.mrf.mxu0
    %v2534 = vadd.f32 0.0, %v2533
    %2535 = vmatmul.f32.gmra.mxu0 %v2479
    %v2536 = vpop.f32.mrf.mxu0
    %v2537 = vadd.f32 0.0, %v2536
    %2538 = vmatmul.f32.gmra.mxu0 %v2481
    %v2539 = vpop.f32.mrf.mxu0
    %v2540 = vadd.f32 0.0, %v2539
    %2541 = vmatmul.f32.gmra.mxu0 %v2483
    %v2542 = vpop.f32.mrf.mxu0
    %v2543 = vadd.f32 0.0, %v2542
    %2544 = vmatmul.f32.gmra.mxu0 %v2485
    %v2545 = vpop.f32.mrf.mxu0
    %v2546 = vadd.f32 0.0, %v2545
    %2547 = vmatmul.f32.gmra.mxu0 %v2487
    %v2548 = vpop.f32.mrf.mxu0
    %v2549 = vadd.f32 0.0, %v2548
    %2550 = vmatmul.f32.gmra.mxu0 %v2489
    %v2551 = vpop.f32.mrf.mxu0
    %v2552 = vadd.f32 0.0, %v2551
    %2553 = vmatmul.f32.gmra.mxu0 %v2491
    %v2554 = vpop.f32.mrf.mxu0
    %v2555 = vadd.f32 0.0, %v2554
    %2556 = vmatmul.f32.gmra.mxu0 %v2493
    %v2557 = vpop.f32.mrf.mxu0
    %v2558 = vadd.f32 0.0, %v2557
    %2559 = vdwg.mxu0
    %2576 = vrot.lane.b32.xlu0 %v2513, 64
    %v2577 = vpop.permute.xlu0 %2576
    %2578 = vrot.lane.b32.xlu0 %v2516, 64
    %v2579 = vpop.permute.xlu0 %2578
    %2580 = vrot.lane.b32.xlu0 %v2519, 64
    %v2581 = vpop.permute.xlu0 %2580
    %2582 = vrot.lane.b32.xlu0 %v2522, 64
    %v2583 = vpop.permute.xlu0 %2582
    %2584 = vrot.lane.b32.xlu0 %v2525, 64
    %v2585 = vpop.permute.xlu0 %2584
    %2586 = vrot.lane.b32.xlu0 %v2528, 64
    %v2587 = vpop.permute.xlu0 %2586
    %2588 = vrot.lane.b32.xlu0 %v2531, 64
    %v2589 = vpop.permute.xlu0 %2588
    %2590 = vrot.lane.b32.xlu0 %v2534, 64
    %v2591 = vpop.permute.xlu0 %2590
    %2592 = vrot.lane.b32.xlu0 %v2537, 64
    %v2593 = vpop.permute.xlu0 %2592
    %2594 = vrot.lane.b32.xlu0 %v2540, 64
    %v2595 = vpop.permute.xlu0 %2594
    %2596 = vrot.lane.b32.xlu0 %v2543, 64
    %v2597 = vpop.permute.xlu0 %2596
    %2598 = vrot.lane.b32.xlu0 %v2546, 64
    %v2599 = vpop.permute.xlu0 %2598
    %2600 = vrot.lane.b32.xlu0 %v2549, 64
    %v2601 = vpop.permute.xlu0 %2600
    %2602 = vrot.lane.b32.xlu0 %v2552, 64
    %v2603 = vpop.permute.xlu0 %2602
    %2604 = vrot.lane.b32.xlu0 %v2555, 64
    %v2605 = vpop.permute.xlu0 %2604
    %2606 = vrot.lane.b32.xlu0 %v2558, 64
    %v2607 = vpop.permute.xlu0 %2606
    %v2624 = vadd.f32 %v1936, %v2577
    %v2625 = vadd.f32 %v1939, %v2579
    %v2626 = vadd.f32 %v1942, %v2581
    %v2627 = vadd.f32 %v1945, %v2583
    %v2628 = vadd.f32 %v1948, %v2585
    %v2629 = vadd.f32 %v1951, %v2587
    %v2630 = vadd.f32 %v1954, %v2589
    %v2631 = vadd.f32 %v1957, %v2591
    %v2632 = vadd.f32 %v1960, %v2593
    %v2633 = vadd.f32 %v1963, %v2595
    %v2634 = vadd.f32 %v1966, %v2597
    %v2635 = vadd.f32 %v1969, %v2599
    %v2636 = vadd.f32 %v1972, %v2601
    %v2637 = vadd.f32 %v1975, %v2603
    %v2638 = vadd.f32 %v1978, %v2605
    %v2639 = vadd.f32 %v1981, %v2607
    %v2640 = vtanh.pop %v2624
    %v2641 = vtanh.pop %v2625
    %v2642 = vtanh.pop %v2626
    %v2643 = vtanh.pop %v2627
    %v2644 = vtanh.pop %v2628
    %v2645 = vtanh.pop %v2629
    %v2646 = vtanh.pop %v2630
    %v2647 = vtanh.pop %v2631
    %v2648 = vtanh.pop %v2632
    %v2649 = vtanh.pop %v2633
    %v2650 = vtanh.pop %v2634
    %v2651 = vtanh.pop %v2635
    %v2652 = vtanh.pop %v2636
    %v2653 = vtanh.pop %v2637
    %v2654 = vtanh.pop %v2638
    %v2655 = vtanh.pop %v2639
    %2656 = vrot.lane.b32.xlu0 %v1467, 64
    %v2657 = vpop.permute.xlu0 %2656
    %2658 = vrot.lane.b32.xlu0 %v1468, 64
    %v2659 = vpop.permute.xlu0 %2658
    %2660 = vrot.lane.b32.xlu0 %v1469, 64
    %v2661 = vpop.permute.xlu0 %2660
    %2662 = vrot.lane.b32.xlu0 %v1470, 64
    %v2663 = vpop.permute.xlu0 %2662
    %2664 = vrot.lane.b32.xlu0 %v1471, 64
    %v2665 = vpop.permute.xlu0 %2664
    %2666 = vrot.lane.b32.xlu0 %v1472, 64
    %v2667 = vpop.permute.xlu0 %2666
    %2668 = vrot.lane.b32.xlu0 %v1473, 64
    %v2669 = vpop.permute.xlu0 %2668
    %2670 = vrot.lane.b32.xlu0 %v1474, 64
    %v2671 = vpop.permute.xlu0 %2670
    %2672 = vrot.lane.b32.xlu0 %v1475, 64
    %v2673 = vpop.permute.xlu0 %2672
    %2674 = vrot.lane.b32.xlu0 %v1476, 64
    %v2675 = vpop.permute.xlu0 %2674
    %2676 = vrot.lane.b32.xlu0 %v1477, 64
    %v2677 = vpop.permute.xlu0 %2676
    %2678 = vrot.lane.b32.xlu0 %v1478, 64
    %v2679 = vpop.permute.xlu0 %2678
    %2680 = vrot.lane.b32.xlu0 %v1479, 64
    %v2681 = vpop.permute.xlu0 %2680
    %2682 = vrot.lane.b32.xlu0 %v1480, 64
    %v2683 = vpop.permute.xlu0 %2682
    %2684 = vrot.lane.b32.xlu0 %v1481, 64
    %v2685 = vpop.permute.xlu0 %2684
    %2686 = vrot.lane.b32.xlu0 %v1482, 64
    %v2687 = vpop.permute.xlu0 %2686
    %v2704 = vsub.f32 %v2640, %v2657
    %v2705 = vsub.f32 %v2641, %v2659
    %v2706 = vsub.f32 %v2642, %v2661
    %v2707 = vsub.f32 %v2643, %v2663
    %v2708 = vsub.f32 %v2644, %v2665
    %v2709 = vsub.f32 %v2645, %v2667
    %v2710 = vsub.f32 %v2646, %v2669
    %v2711 = vsub.f32 %v2647, %v2671
    %v2712 = vsub.f32 %v2648, %v2673
    %v2713 = vsub.f32 %v2649, %v2675
    %v2714 = vsub.f32 %v2650, %v2677
    %v2715 = vsub.f32 %v2651, %v2679
    %v2716 = vsub.f32 %v2652, %v2681
    %v2717 = vsub.f32 %v2653, %v2683
    %v2718 = vsub.f32 %v2654, %v2685
    %v2719 = vsub.f32 %v2655, %v2687
    %2736 = vrot.lane.b32.xlu0 %v2704, 64
    %v2737 = vpop.permute.xlu0 %2736
    %2738 = vrot.lane.b32.xlu0 %v2705, 64
    %v2739 = vpop.permute.xlu0 %2738
    %2740 = vrot.lane.b32.xlu0 %v2706, 64
    %v2741 = vpop.permute.xlu0 %2740
    %2742 = vrot.lane.b32.xlu0 %v2707, 64
    %v2743 = vpop.permute.xlu0 %2742
    %2744 = vrot.lane.b32.xlu0 %v2708, 64
    %v2745 = vpop.permute.xlu0 %2744
    %2746 = vrot.lane.b32.xlu0 %v2709, 64
    %v2747 = vpop.permute.xlu0 %2746
    %2748 = vrot.lane.b32.xlu0 %v2710, 64
    %v2749 = vpop.permute.xlu0 %2748
    %2750 = vrot.lane.b32.xlu0 %v2711, 64
    %v2751 = vpop.permute.xlu0 %2750
    %2752 = vrot.lane.b32.xlu0 %v2712, 64
    %v2753 = vpop.permute.xlu0 %2752
    %2754 = vrot.lane.b32.xlu0 %v2713, 64
    %v2755 = vpop.permute.xlu0 %2754
    %2756 = vrot.lane.b32.xlu0 %v2714, 64
    %v2757 = vpop.permute.xlu0 %2756
    %2758 = vrot.lane.b32.xlu0 %v2715, 64
    %v2759 = vpop.permute.xlu0 %2758
    %2760 = vrot.lane.b32.xlu0 %v2716, 64
    %v2761 = vpop.permute.xlu0 %2760
    %2762 = vrot.lane.b32.xlu0 %v2717, 64
    %v2763 = vpop.permute.xlu0 %2762
    %2764 = vrot.lane.b32.xlu0 %v2718, 64
    %v2765 = vpop.permute.xlu0 %2764
    %2766 = vrot.lane.b32.xlu0 %v2719, 64
    %v2767 = vpop.permute.xlu0 %2766
    %v2784 = vmul.f32 %v2125, %v2737
    %v2785 = vmul.f32 %v2140, %v2739
    %v2786 = vmul.f32 %v2155, %v2741
    %v2787 = vmul.f32 %v2170, %v2743
    %v2788 = vmul.f32 %v2185, %v2745
    %v2789 = vmul.f32 %v2200, %v2747
    %v2790 = vmul.f32 %v2215, %v2749
    %v2791 = vmul.f32 %v2230, %v2751
    %v2792 = vmul.f32 %v2245, %v2753
    %v2793 = vmul.f32 %v2260, %v2755
    %v2794 = vmul.f32 %v2275, %v2757
    %v2795 = vmul.f32 %v2290, %v2759
    %v2796 = vmul.f32 %v2305, %v2761
    %v2797 = vmul.f32 %v2320, %v2763
    %v2798 = vmul.f32 %v2335, %v2765
    %v2799 = vmul.f32 %v2350, %v2767
    %v2800 = vadd.f32 %v1467, %v2784
    %v2801 = vadd.f32 %v1468, %v2785
    %v2802 = vadd.f32 %v1469, %v2786
    %v2803 = vadd.f32 %v1470, %v2787
    %v2804 = vadd.f32 %v1471, %v2788
    %v2805 = vadd.f32 %v1472, %v2789
    %v2806 = vadd.f32 %v1473, %v2790
    %v2807 = vadd.f32 %v1474, %v2791
    %v2808 = vadd.f32 %v1475, %v2792
    %v2809 = vadd.f32 %v1476, %v2793
    %v2810 = vadd.f32 %v1477, %v2794
    %v2811 = vadd.f32 %v1478, %v2795
    %v2812 = vadd.f32 %v1479, %v2796
    %v2813 = vadd.f32 %v1480, %v2797
    %v2814 = vadd.f32 %v1481, %v2798
    %v2815 = vadd.f32 %v1482, %v2799
    %2816 = vst.msk [vmem:[%s8] sm:$0xff] %vm145, %v2800
    %2817 = vst.msk [vmem:[%s8 + $0x8] sm:$0xff] %vm145, %v2801
    %2818 = vst.msk [vmem:[%s8 + $0x10] sm:$0xff] %vm145, %v2802
    %2819 = vst.msk [vmem:[%s8 + $0x18] sm:$0xff] %vm145, %v2803
    %2820 = vst.msk [vmem:[%s8 + $0x20] sm:$0xff] %vm145, %v2804
    %2821 = vst.msk [vmem:[%s8 + $0x28] sm:$0xff] %vm145, %v2805
    %2822 = vst.msk [vmem:[%s8 + $0x30] sm:$0xff] %vm145, %v2806
    %2823 = vst.msk [vmem:[%s8 + $0x38] sm:$0xff] %vm145, %v2807
    %2824 = vst.msk [vmem:[%s8 + $0x40] sm:$0xff] %vm145, %v2808
    %2825 = vst.msk [vmem:[%s8 + $0x48] sm:$0xff] %vm145, %v2809
    %2826 = vst.msk [vmem:[%s8 + $0x50] sm:$0xff] %vm145, %v2810
    %2827 = vst.msk [vmem:[%s8 + $0x58] sm:$0xff] %vm145, %v2811
    %2828 = vst.msk [vmem:[%s8 + $0x60] sm:$0xff] %vm145, %v2812
    %2829 = vst.msk [vmem:[%s8 + $0x68] sm:$0xff] %vm145, %v2813
    %2830 = vst.msk [vmem:[%s8 + $0x70] sm:$0xff] %vm145, %v2814
    %2831 = vst.msk [vmem:[%s8 + $0x78] sm:$0xff] %vm145, %v2815
    // Predicated region
    $region46: #{tpu_custom_call.1} parent=1 // pred_check
      _
    $region47: #{tpu_custom_call.1} parent=1 // pred_check_branch
      %2833 = sbr.rel (0) target = $region49
    $region48: #{tpu_custom_call.1} parent=1 // pred_region
      _
    $region49: #{tpu_custom_call.1} parent=1 // pred_fallthru
      _
    // Predicated region
    $region50: #{tpu_custom_call.1} parent=1 // pred_check
      _
    $region51: #{tpu_custom_call.1} parent=1 // pred_check_branch
      %2835 = sbr.rel (0) target = $region53
    $region52: #{tpu_custom_call.1} parent=1 // pred_region
      _
    $region53: #{tpu_custom_call.1} parent=1 // pred_fallthru
      _
    %2836 = vsyncpa [#allocation3], 1
    %2837 = vsyncpa [#allocation5], 1

</llo_original>
